<compile_context>
chip_gen: v6e
topology: v6e:2x2x1
jax: 0.10.0
libtpu: 0.0.40
codegen_flags: <defaults>
</compile_context>

<pallas_src>
import functools

import jax
import jax.numpy as jnp
from jax.experimental import pallas as pl
from jax.experimental.pallas import tpu as pltpu


def _round_up(x, m):
    return (x + m - 1) // m * m


def _disc_block1_kernel(xph_ref, w1_ref, b1_ref, w2_ref, ws_ref, bc_ref, o_ref, *, wp2):
    """One image per grid step.

    xph_ref: (4, Cp, Lp)   bf16  2x2 sub-pixel phase maps of the zero-padded input,
                                 flattened spatially with row stride wp2
    w1_ref : (9, OCp, Cp)  bf16  conv1 3x3 weights, tap-major (ki*3+kj)
    b1_ref : (OCp, 1)      f32   conv1 bias
    w2_ref : (OCp, OCp)    bf16  conv2 (1x1) weights
    ws_ref : (OCp, Cp)     bf16  shortcut (1x1) weights
    bc_ref : (OCp, 1)      f32   combined bias b2 + bs
    o_ref  : (OCp, Lout)   f32   pooled-resolution output, flat rows of stride wp2
    """
    ocp, lout = o_ref.shape
    b1 = b1_ref[...]

    # Main path: 0.25 * sum over the 4 output sub-pixel phases of relu(conv3x3 + b1).
    pooled = jnp.zeros((ocp, lout), jnp.float32)
    for dh in range(2):
        for dw in range(2):
            acc = jnp.zeros((ocp, lout), jnp.float32)
            for ki in range(3):
                for kj in range(3):
                    pa, si = (dh + ki) & 1, (dh + ki) >> 1
                    pb, sj = (dw + kj) & 1, (dw + kj) >> 1
                    xs = xph_ref[2 * pa + pb, :, pl.ds(si * wp2 + sj, lout)]
                    acc = acc + jnp.dot(w1_ref[ki * 3 + kj], xs,
                                        preferred_element_type=jnp.float32)
            pooled = pooled + jnp.maximum(acc + b1, 0.0)
    pooled = pooled * 0.25

    # Shortcut path: 2x2 mean-pool of x, rebuilt from the same phase maps.
    px = (xph_ref[3, :, pl.ds(0, lout)].astype(jnp.float32)
          + xph_ref[2, :, pl.ds(1, lout)].astype(jnp.float32)
          + xph_ref[1, :, pl.ds(wp2, lout)].astype(jnp.float32)
          + xph_ref[0, :, pl.ds(wp2 + 1, lout)].astype(jnp.float32)) * 0.25

    # Both 1x1 convs at pooled resolution, plus combined bias.
    out = (jnp.dot(w2_ref[...], pooled.astype(jnp.bfloat16),
                   preferred_element_type=jnp.float32)
           + jnp.dot(ws_ref[...], px.astype(jnp.bfloat16),
                     preferred_element_type=jnp.float32)
           + bc_ref[...])
    o_ref[...] = out.astype(o_ref.dtype)


@jax.jit
def disc_block1(x, w1, b1, w2, b2, ws, bs):
    """Forward of DiscBlock1.

    x : (N, 3, H, W) f32 ; w1: (OC,3,3,3) ; b1: (OC,)
    w2: (OC,OC,1,1)      ; b2: (OC,)
    ws: (OC,3,1,1)       ; bs: (OC,)
    returns (N, OC, H//2, W//2) f32
    """
    N, C, H, W = x.shape
    assert C == 3 and H % 2 == 0 and W % 2 == 0
    OC = w1.shape[0]
    H2, W2 = H // 2, W // 2
    Hp2, Wp2 = H2 + 1, W2 + 1          # padded-input phase-map dims (pad=1 each side)
    Cp = 8                             # input channels padded to a sublane granule
    OCp = _round_up(OC, 8)
    Lout = _round_up(H2 * Wp2, 128)    # lane-dense output width
    Lp = _round_up(Wp2 + 1 + Lout, 128)  # phase-map flat length (covers every tap slice)

    # --- layout plumbing (input-sized, cheap): pad spatially, split into 2x2 sub-pixel
    #     phases, flatten spatial, pad channels/lanes, cast to bf16.
    x_pad = jnp.pad(x, ((0, 0), (0, 0), (1, 1), (1, 1)))
    xph = x_pad.reshape(N, C, Hp2, 2, Wp2, 2).transpose(0, 3, 5, 1, 2, 4)
    xph = xph.reshape(N, 4, C, Hp2 * Wp2)
    xph = jnp.pad(xph, ((0, 0), (0, 0), (0, Cp - C), (0, Lp - Hp2 * Wp2)))
    xph = xph.astype(jnp.bfloat16)

    # Weights: tap-major conv1; 1x1 convs as plain matrices; zero-pad to (OCp, Cp).
    w1t = jnp.transpose(w1, (2, 3, 0, 1)).reshape(9, OC, C)
    w1t = jnp.pad(w1t, ((0, 0), (0, OCp - OC), (0, Cp - C))).astype(jnp.bfloat16)
    b1v = jnp.pad(b1, (0, OCp - OC)).reshape(OCp, 1).astype(jnp.float32)
    w2m = jnp.pad(w2.reshape(OC, OC), ((0, OCp - OC), (0, OCp - OC))).astype(jnp.bfloat16)
    wsm = jnp.pad(ws.reshape(OC, C), ((0, OCp - OC), (0, Cp - C))).astype(jnp.bfloat16)
    bcv = jnp.pad(b2 + bs, (0, OCp - OC)).reshape(OCp, 1).astype(jnp.float32)

    kernel = functools.partial(_disc_block1_kernel, wp2=Wp2)
    out_flat = pl.pallas_call(
        kernel,
        out_shape=jax.ShapeDtypeStruct((N, OCp, Lout), jnp.float32),
        grid=(N,),
        in_specs=[
            pl.BlockSpec((None, 4, Cp, Lp), lambda n: (n, 0, 0, 0)),
            pl.BlockSpec((9, OCp, Cp), lambda n: (0, 0, 0)),
            pl.BlockSpec((OCp, 1), lambda n: (0, 0)),
            pl.BlockSpec((OCp, OCp), lambda n: (0, 0)),
            pl.BlockSpec((OCp, Cp), lambda n: (0, 0)),
            pl.BlockSpec((OCp, 1), lambda n: (0, 0)),
        ],
        out_specs=pl.BlockSpec((None, OCp, Lout), lambda n: (n, 0, 0)),
        compiler_params=pltpu.CompilerParams(
            dimension_semantics=("parallel",)),
    )(xph, w1t, b1v, w2m, wsm, bcv)

    # Strip channel / lane padding: flat rows have stride Wp2 with W2 valid columns.
    out = out_flat[:, :OC, :H2 * Wp2].reshape(N, OC, H2, Wp2)[:, :, :, :W2]
    return out


if __name__ == "__main__":
    batch, n_output, H, W = 2, 8, 16, 16

    key = jax.random.PRNGKey(0)
    kx, k1, kb1, k2, kb2, k3, kb3 = jax.random.split(key, 7)
    x = jax.random.normal(kx, (batch, 3, H, W), dtype=jnp.float32)
    w1 = jax.random.normal(k1, (n_output, 3, 3, 3), dtype=jnp.float32) * 0.1
    b1 = jax.random.normal(kb1, (n_output,), dtype=jnp.float32) * 0.1
    w2 = jax.random.normal(k2, (n_output, n_output, 1, 1), dtype=jnp.float32) * 0.1
    b2 = jax.random.normal(kb2, (n_output,), dtype=jnp.float32) * 0.1
    ws = jax.random.normal(k3, (n_output, 3, 1, 1), dtype=jnp.float32) * 0.1
    bs = jax.random.normal(kb3, (n_output,), dtype=jnp.float32) * 0.1

    out = disc_block1(x, w1, b1, w2, b2, ws, bs)
    out = jax.block_until_ready(out)
    assert out.shape == (batch, n_output, H // 2, W // 2), out.shape

    # Reference (f32 math; x and weights quantized to bf16 like the kernel's operands).
    def q(a):
        return a.astype(jnp.bfloat16).astype(jnp.float32)

    def conv(inp, w, b, pad):
        return jax.lax.conv_general_dilated(
            inp, w, window_strides=(1, 1), padding=((pad, pad), (pad, pad)),
            dimension_numbers=("NCHW", "OIHW", "NCHW"),
        ) + b.reshape(1, -1, 1, 1)

    def pool(a):
        return (a[:, :, ::2, ::2] + a[:, :, 1::2, ::2]
                + a[:, :, ::2, 1::2] + a[:, :, 1::2, 1::2]) / 4.0

    xq = q(x)
    main = jnp.maximum(conv(xq, q(w1), b1, 1), 0.0)
    main = pool(conv(main, q(w2), b2, 0))
    short = conv(pool(xq), q(ws), bs, 0)
    ref = main + short

    err = float(jnp.max(jnp.abs(out - ref)))
    assert jnp.allclose(out, ref, atol=3e-2, rtol=3e-2), err
    print("KERNEL_OK")
</pallas_src>

<mosaic_0001>
module attributes {stable_mosaic.version = 11 : i64} {
  func.func @_disc_block1_kernel(%arg0: i32, %arg1: memref<1x4x8x256xbf16, #tpu.memory_space<vmem>>, %arg2: memref<9x8x8xbf16, #tpu.memory_space<vmem>>, %arg3: memref<8x1xf32, #tpu.memory_space<vmem>>, %arg4: memref<8x8xbf16, #tpu.memory_space<vmem>>, %arg5: memref<8x8xbf16, #tpu.memory_space<vmem>>, %arg6: memref<8x1xf32, #tpu.memory_space<vmem>>, %arg7: memref<1x8x128xf32, #tpu.memory_space<vmem>>) attributes {dimension_semantics = [#tpu.dimension_semantics<parallel>], iteration_bounds = array<i64: 2>, scalar_prefetch = 0 : i64, scratch_operands = 0 : i64, tpu.core_type = #tpu.core_type<tc>, window_params = [{transform_indices = @transform_0, window_bounds = array<i64: 1, 4, 8, 256>}, {pipeline_mode = #tpu.pipeline_mode<synchronous>, transform_indices = @transform_1, window_bounds = array<i64: 9, 8, 8>}, {pipeline_mode = #tpu.pipeline_mode<synchronous>, transform_indices = @transform_2, window_bounds = array<i64: 8, 1>}, {pipeline_mode = #tpu.pipeline_mode<synchronous>, transform_indices = @transform_3, window_bounds = array<i64: 8, 8>}, {pipeline_mode = #tpu.pipeline_mode<synchronous>, transform_indices = @transform_4, window_bounds = array<i64: 8, 8>}, {pipeline_mode = #tpu.pipeline_mode<synchronous>, transform_indices = @transform_5, window_bounds = array<i64: 8, 1>}, {transform_indices = @transform_6, window_bounds = array<i64: 1, 8, 128>}]} {
    %c0 = arith.constant 0 : index
    %c0_0 = arith.constant 0 : index
    %0 = vector.load %arg3[%c0, %c0_0] : memref<8x1xf32, #tpu.memory_space<vmem>>, vector<8x1xf32>
    %cst = arith.constant 0.000000e+00 : f32
    %1 = vector.broadcast %cst : f32 to vector<8x128xf32>
    %cst_1 = arith.constant 0.000000e+00 : f32
    %2 = vector.broadcast %cst_1 : f32 to vector<8x128xf32>
    %c0_2 = arith.constant 0 : index
    %c0_3 = arith.constant 0 : index
    %c0_4 = arith.constant 0 : index
    %c0_5 = arith.constant 0 : index
    %3 = vector.load %arg1[%c0_2, %c0_3, %c0_4, %c0_5] : memref<1x4x8x256xbf16, #tpu.memory_space<vmem>>, vector<1x1x8x128xbf16>
    %4 = vector.shape_cast %3 : vector<1x1x8x128xbf16> to vector<8x128xbf16>
    %c0_6 = arith.constant 0 : index
    %c0_7 = arith.constant 0 : index
    %c0_8 = arith.constant 0 : index
    %5 = vector.load %arg2[%c0_6, %c0_7, %c0_8] : memref<9x8x8xbf16, #tpu.memory_space<vmem>>, vector<1x8x8xbf16>
    %6 = vector.shape_cast %5 : vector<1x8x8xbf16> to vector<8x8xbf16>
    %cst_9 = arith.constant dense<0.000000e+00> : vector<8x128xf32>
    %7 = tpu.matmul %6, %4, %cst_9 {dimension_numbers = #tpu.dot_dimension_numbers<[1], [0], [0], [1], [0, 0, 1, 1], [], []>} : vector<8x8xbf16>, vector<8x128xbf16>, vector<8x128xf32> -> vector<8x128xf32>
    %8 = arith.addf %2, %7 : vector<8x128xf32>
    %c0_10 = arith.constant 0 : index
    %c1 = arith.constant 1 : index
    %c0_11 = arith.constant 0 : index
    %c0_12 = arith.constant 0 : index
    %9 = vector.load %arg1[%c0_10, %c1, %c0_11, %c0_12] : memref<1x4x8x256xbf16, #tpu.memory_space<vmem>>, vector<1x1x8x128xbf16>
    %10 = vector.shape_cast %9 : vector<1x1x8x128xbf16> to vector<8x128xbf16>
    %c1_13 = arith.constant 1 : index
    %c0_14 = arith.constant 0 : index
    %c0_15 = arith.constant 0 : index
    %11 = vector.load %arg2[%c1_13, %c0_14, %c0_15] : memref<9x8x8xbf16, #tpu.memory_space<vmem>>, vector<1x8x8xbf16>
    %12 = vector.shape_cast %11 : vector<1x8x8xbf16> to vector<8x8xbf16>
    %cst_16 = arith.constant dense<0.000000e+00> : vector<8x128xf32>
    %13 = tpu.matmul %12, %10, %cst_16 {dimension_numbers = #tpu.dot_dimension_numbers<[1], [0], [0], [1], [0, 0, 1, 1], [], []>} : vector<8x8xbf16>, vector<8x128xbf16>, vector<8x128xf32> -> vector<8x128xf32>
    %14 = arith.addf %8, %13 : vector<8x128xf32>
    %c0_17 = arith.constant 0 : index
    %c0_18 = arith.constant 0 : index
    %c0_19 = arith.constant 0 : index
    %c1_20 = arith.constant 1 : index
    %15 = vector.load %arg1[%c0_17, %c0_18, %c0_19, %c1_20] : memref<1x4x8x256xbf16, #tpu.memory_space<vmem>>, vector<1x1x8x128xbf16>
    %16 = vector.shape_cast %15 : vector<1x1x8x128xbf16> to vector<8x128xbf16>
    %c2 = arith.constant 2 : index
    %c0_21 = arith.constant 0 : index
    %c0_22 = arith.constant 0 : index
    %17 = vector.load %arg2[%c2, %c0_21, %c0_22] : memref<9x8x8xbf16, #tpu.memory_space<vmem>>, vector<1x8x8xbf16>
    %18 = vector.shape_cast %17 : vector<1x8x8xbf16> to vector<8x8xbf16>
    %cst_23 = arith.constant dense<0.000000e+00> : vector<8x128xf32>
    %19 = tpu.matmul %18, %16, %cst_23 {dimension_numbers = #tpu.dot_dimension_numbers<[1], [0], [0], [1], [0, 0, 1, 1], [], []>} : vector<8x8xbf16>, vector<8x128xbf16>, vector<8x128xf32> -> vector<8x128xf32>
    %20 = arith.addf %14, %19 : vector<8x128xf32>
    %c0_24 = arith.constant 0 : index
    %c2_25 = arith.constant 2 : index
    %c0_26 = arith.constant 0 : index
    %c0_27 = arith.constant 0 : index
    %21 = vector.load %arg1[%c0_24, %c2_25, %c0_26, %c0_27] : memref<1x4x8x256xbf16, #tpu.memory_space<vmem>>, vector<1x1x8x128xbf16>
    %22 = vector.shape_cast %21 : vector<1x1x8x128xbf16> to vector<8x128xbf16>
    %c3 = arith.constant 3 : index
    %c0_28 = arith.constant 0 : index
    %c0_29 = arith.constant 0 : index
    %23 = vector.load %arg2[%c3, %c0_28, %c0_29] : memref<9x8x8xbf16, #tpu.memory_space<vmem>>, vector<1x8x8xbf16>
    %24 = vector.shape_cast %23 : vector<1x8x8xbf16> to vector<8x8xbf16>
    %cst_30 = arith.constant dense<0.000000e+00> : vector<8x128xf32>
    %25 = tpu.matmul %24, %22, %cst_30 {dimension_numbers = #tpu.dot_dimension_numbers<[1], [0], [0], [1], [0, 0, 1, 1], [], []>} : vector<8x8xbf16>, vector<8x128xbf16>, vector<8x128xf32> -> vector<8x128xf32>
    %26 = arith.addf %20, %25 : vector<8x128xf32>
    %c0_31 = arith.constant 0 : index
    %c3_32 = arith.constant 3 : index
    %c0_33 = arith.constant 0 : index
    %c0_34 = arith.constant 0 : index
    %27 = vector.load %arg1[%c0_31, %c3_32, %c0_33, %c0_34] : memref<1x4x8x256xbf16, #tpu.memory_space<vmem>>, vector<1x1x8x128xbf16>
    %28 = vector.shape_cast %27 : vector<1x1x8x128xbf16> to vector<8x128xbf16>
    %c4 = arith.constant 4 : index
    %c0_35 = arith.constant 0 : index
    %c0_36 = arith.constant 0 : index
    %29 = vector.load %arg2[%c4, %c0_35, %c0_36] : memref<9x8x8xbf16, #tpu.memory_space<vmem>>, vector<1x8x8xbf16>
    %30 = vector.shape_cast %29 : vector<1x8x8xbf16> to vector<8x8xbf16>
    %cst_37 = arith.constant dense<0.000000e+00> : vector<8x128xf32>
    %31 = tpu.matmul %30, %28, %cst_37 {dimension_numbers = #tpu.dot_dimension_numbers<[1], [0], [0], [1], [0, 0, 1, 1], [], []>} : vector<8x8xbf16>, vector<8x128xbf16>, vector<8x128xf32> -> vector<8x128xf32>
    %32 = arith.addf %26, %31 : vector<8x128xf32>
    %c0_38 = arith.constant 0 : index
    %c2_39 = arith.constant 2 : index
    %c0_40 = arith.constant 0 : index
    %c1_41 = arith.constant 1 : index
    %33 = vector.load %arg1[%c0_38, %c2_39, %c0_40, %c1_41] : memref<1x4x8x256xbf16, #tpu.memory_space<vmem>>, vector<1x1x8x128xbf16>
    %34 = vector.shape_cast %33 : vector<1x1x8x128xbf16> to vector<8x128xbf16>
    %c5 = arith.constant 5 : index
    %c0_42 = arith.constant 0 : index
    %c0_43 = arith.constant 0 : index
    %35 = vector.load %arg2[%c5, %c0_42, %c0_43] : memref<9x8x8xbf16, #tpu.memory_space<vmem>>, vector<1x8x8xbf16>
    %36 = vector.shape_cast %35 : vector<1x8x8xbf16> to vector<8x8xbf16>
    %cst_44 = arith.constant dense<0.000000e+00> : vector<8x128xf32>
    %37 = tpu.matmul %36, %34, %cst_44 {dimension_numbers = #tpu.dot_dimension_numbers<[1], [0], [0], [1], [0, 0, 1, 1], [], []>} : vector<8x8xbf16>, vector<8x128xbf16>, vector<8x128xf32> -> vector<8x128xf32>
    %38 = arith.addf %32, %37 : vector<8x128xf32>
    %c0_45 = arith.constant 0 : index
    %c0_46 = arith.constant 0 : index
    %c0_47 = arith.constant 0 : index
    %c9 = arith.constant 9 : index
    %39 = vector.load %arg1[%c0_45, %c0_46, %c0_47, %c9] : memref<1x4x8x256xbf16, #tpu.memory_space<vmem>>, vector<1x1x8x128xbf16>
    %40 = vector.shape_cast %39 : vector<1x1x8x128xbf16> to vector<8x128xbf16>
    %c6 = arith.constant 6 : index
    %c0_48 = arith.constant 0 : index
    %c0_49 = arith.constant 0 : index
    %41 = vector.load %arg2[%c6, %c0_48, %c0_49] : memref<9x8x8xbf16, #tpu.memory_space<vmem>>, vector<1x8x8xbf16>
    %42 = vector.shape_cast %41 : vector<1x8x8xbf16> to vector<8x8xbf16>
    %cst_50 = arith.constant dense<0.000000e+00> : vector<8x128xf32>
    %43 = tpu.matmul %42, %40, %cst_50 {dimension_numbers = #tpu.dot_dimension_numbers<[1], [0], [0], [1], [0, 0, 1, 1], [], []>} : vector<8x8xbf16>, vector<8x128xbf16>, vector<8x128xf32> -> vector<8x128xf32>
    %44 = arith.addf %38, %43 : vector<8x128xf32>
    %c0_51 = arith.constant 0 : index
    %c1_52 = arith.constant 1 : index
    %c0_53 = arith.constant 0 : index
    %c9_54 = arith.constant 9 : index
    %45 = vector.load %arg1[%c0_51, %c1_52, %c0_53, %c9_54] : memref<1x4x8x256xbf16, #tpu.memory_space<vmem>>, vector<1x1x8x128xbf16>
    %46 = vector.shape_cast %45 : vector<1x1x8x128xbf16> to vector<8x128xbf16>
    %c7 = arith.constant 7 : index
    %c0_55 = arith.constant 0 : index
    %c0_56 = arith.constant 0 : index
    %47 = vector.load %arg2[%c7, %c0_55, %c0_56] : memref<9x8x8xbf16, #tpu.memory_space<vmem>>, vector<1x8x8xbf16>
    %48 = vector.shape_cast %47 : vector<1x8x8xbf16> to vector<8x8xbf16>
    %cst_57 = arith.constant dense<0.000000e+00> : vector<8x128xf32>
    %49 = tpu.matmul %48, %46, %cst_57 {dimension_numbers = #tpu.dot_dimension_numbers<[1], [0], [0], [1], [0, 0, 1, 1], [], []>} : vector<8x8xbf16>, vector<8x128xbf16>, vector<8x128xf32> -> vector<8x128xf32>
    %50 = arith.addf %44, %49 : vector<8x128xf32>
    %c0_58 = arith.constant 0 : index
    %c0_59 = arith.constant 0 : index
    %c0_60 = arith.constant 0 : index
    %c10 = arith.constant 10 : index
    %51 = vector.load %arg1[%c0_58, %c0_59, %c0_60, %c10] : memref<1x4x8x256xbf16, #tpu.memory_space<vmem>>, vector<1x1x8x128xbf16>
    %52 = vector.shape_cast %51 : vector<1x1x8x128xbf16> to vector<8x128xbf16>
    %c8 = arith.constant 8 : index
    %c0_61 = arith.constant 0 : index
    %c0_62 = arith.constant 0 : index
    %53 = vector.load %arg2[%c8, %c0_61, %c0_62] : memref<9x8x8xbf16, #tpu.memory_space<vmem>>, vector<1x8x8xbf16>
    %54 = vector.shape_cast %53 : vector<1x8x8xbf16> to vector<8x8xbf16>
    %cst_63 = arith.constant dense<0.000000e+00> : vector<8x128xf32>
    %55 = tpu.matmul %54, %52, %cst_63 {dimension_numbers = #tpu.dot_dimension_numbers<[1], [0], [0], [1], [0, 0, 1, 1], [], []>} : vector<8x8xbf16>, vector<8x128xbf16>, vector<8x128xf32> -> vector<8x128xf32>
    %56 = arith.addf %50, %55 : vector<8x128xf32>
    %57 = vector.broadcast %0 : vector<8x1xf32> to vector<8x128xf32>
    %58 = arith.addf %56, %57 : vector<8x128xf32>
    %cst_64 = arith.constant 0.000000e+00 : f32
    %59 = vector.broadcast %cst_64 : f32 to vector<8x128xf32>
    %60 = arith.maximumf %58, %59 : vector<8x128xf32>
    %61 = arith.addf %1, %60 : vector<8x128xf32>
    %cst_65 = arith.constant 0.000000e+00 : f32
    %62 = vector.broadcast %cst_65 : f32 to vector<8x128xf32>
    %c0_66 = arith.constant 0 : index
    %c1_67 = arith.constant 1 : index
    %c0_68 = arith.constant 0 : index
    %c0_69 = arith.constant 0 : index
    %63 = vector.load %arg1[%c0_66, %c1_67, %c0_68, %c0_69] : memref<1x4x8x256xbf16, #tpu.memory_space<vmem>>, vector<1x1x8x128xbf16>
    %64 = vector.shape_cast %63 : vector<1x1x8x128xbf16> to vector<8x128xbf16>
    %c0_70 = arith.constant 0 : index
    %c0_71 = arith.constant 0 : index
    %c0_72 = arith.constant 0 : index
    %65 = vector.load %arg2[%c0_70, %c0_71, %c0_72] : memref<9x8x8xbf16, #tpu.memory_space<vmem>>, vector<1x8x8xbf16>
    %66 = vector.shape_cast %65 : vector<1x8x8xbf16> to vector<8x8xbf16>
    %cst_73 = arith.constant dense<0.000000e+00> : vector<8x128xf32>
    %67 = tpu.matmul %66, %64, %cst_73 {dimension_numbers = #tpu.dot_dimension_numbers<[1], [0], [0], [1], [0, 0, 1, 1], [], []>} : vector<8x8xbf16>, vector<8x128xbf16>, vector<8x128xf32> -> vector<8x128xf32>
    %68 = arith.addf %62, %67 : vector<8x128xf32>
    %c0_74 = arith.constant 0 : index
    %c0_75 = arith.constant 0 : index
    %c0_76 = arith.constant 0 : index
    %c1_77 = arith.constant 1 : index
    %69 = vector.load %arg1[%c0_74, %c0_75, %c0_76, %c1_77] : memref<1x4x8x256xbf16, #tpu.memory_space<vmem>>, vector<1x1x8x128xbf16>
    %70 = vector.shape_cast %69 : vector<1x1x8x128xbf16> to vector<8x128xbf16>
    %c1_78 = arith.constant 1 : index
    %c0_79 = arith.constant 0 : index
    %c0_80 = arith.constant 0 : index
    %71 = vector.load %arg2[%c1_78, %c0_79, %c0_80] : memref<9x8x8xbf16, #tpu.memory_space<vmem>>, vector<1x8x8xbf16>
    %72 = vector.shape_cast %71 : vector<1x8x8xbf16> to vector<8x8xbf16>
    %cst_81 = arith.constant dense<0.000000e+00> : vector<8x128xf32>
    %73 = tpu.matmul %72, %70, %cst_81 {dimension_numbers = #tpu.dot_dimension_numbers<[1], [0], [0], [1], [0, 0, 1, 1], [], []>} : vector<8x8xbf16>, vector<8x128xbf16>, vector<8x128xf32> -> vector<8x128xf32>
    %74 = arith.addf %68, %73 : vector<8x128xf32>
    %c0_82 = arith.constant 0 : index
    %c1_83 = arith.constant 1 : index
    %c0_84 = arith.constant 0 : index
    %c1_85 = arith.constant 1 : index
    %75 = vector.load %arg1[%c0_82, %c1_83, %c0_84, %c1_85] : memref<1x4x8x256xbf16, #tpu.memory_space<vmem>>, vector<1x1x8x128xbf16>
    %76 = vector.shape_cast %75 : vector<1x1x8x128xbf16> to vector<8x128xbf16>
    %c2_86 = arith.constant 2 : index
    %c0_87 = arith.constant 0 : index
    %c0_88 = arith.constant 0 : index
    %77 = vector.load %arg2[%c2_86, %c0_87, %c0_88] : memref<9x8x8xbf16, #tpu.memory_space<vmem>>, vector<1x8x8xbf16>
    %78 = vector.shape_cast %77 : vector<1x8x8xbf16> to vector<8x8xbf16>
    %cst_89 = arith.constant dense<0.000000e+00> : vector<8x128xf32>
    %79 = tpu.matmul %78, %76, %cst_89 {dimension_numbers = #tpu.dot_dimension_numbers<[1], [0], [0], [1], [0, 0, 1, 1], [], []>} : vector<8x8xbf16>, vector<8x128xbf16>, vector<8x128xf32> -> vector<8x128xf32>
    %80 = arith.addf %74, %79 : vector<8x128xf32>
    %c0_90 = arith.constant 0 : index
    %c3_91 = arith.constant 3 : index
    %c0_92 = arith.constant 0 : index
    %c0_93 = arith.constant 0 : index
    %81 = vector.load %arg1[%c0_90, %c3_91, %c0_92, %c0_93] : memref<1x4x8x256xbf16, #tpu.memory_space<vmem>>, vector<1x1x8x128xbf16>
    %82 = vector.shape_cast %81 : vector<1x1x8x128xbf16> to vector<8x128xbf16>
    %c3_94 = arith.constant 3 : index
    %c0_95 = arith.constant 0 : index
    %c0_96 = arith.constant 0 : index
    %83 = vector.load %arg2[%c3_94, %c0_95, %c0_96] : memref<9x8x8xbf16, #tpu.memory_space<vmem>>, vector<1x8x8xbf16>
    %84 = vector.shape_cast %83 : vector<1x8x8xbf16> to vector<8x8xbf16>
    %cst_97 = arith.constant dense<0.000000e+00> : vector<8x128xf32>
    %85 = tpu.matmul %84, %82, %cst_97 {dimension_numbers = #tpu.dot_dimension_numbers<[1], [0], [0], [1], [0, 0, 1, 1], [], []>} : vector<8x8xbf16>, vector<8x128xbf16>, vector<8x128xf32> -> vector<8x128xf32>
    %86 = arith.addf %80, %85 : vector<8x128xf32>
    %c0_98 = arith.constant 0 : index
    %c2_99 = arith.constant 2 : index
    %c0_100 = arith.constant 0 : index
    %c1_101 = arith.constant 1 : index
    %87 = vector.load %arg1[%c0_98, %c2_99, %c0_100, %c1_101] : memref<1x4x8x256xbf16, #tpu.memory_space<vmem>>, vector<1x1x8x128xbf16>
    %88 = vector.shape_cast %87 : vector<1x1x8x128xbf16> to vector<8x128xbf16>
    %c4_102 = arith.constant 4 : index
    %c0_103 = arith.constant 0 : index
    %c0_104 = arith.constant 0 : index
    %89 = vector.load %arg2[%c4_102, %c0_103, %c0_104] : memref<9x8x8xbf16, #tpu.memory_space<vmem>>, vector<1x8x8xbf16>
    %90 = vector.shape_cast %89 : vector<1x8x8xbf16> to vector<8x8xbf16>
    %cst_105 = arith.constant dense<0.000000e+00> : vector<8x128xf32>
    %91 = tpu.matmul %90, %88, %cst_105 {dimension_numbers = #tpu.dot_dimension_numbers<[1], [0], [0], [1], [0, 0, 1, 1], [], []>} : vector<8x8xbf16>, vector<8x128xbf16>, vector<8x128xf32> -> vector<8x128xf32>
    %92 = arith.addf %86, %91 : vector<8x128xf32>
    %c0_106 = arith.constant 0 : index
    %c3_107 = arith.constant 3 : index
    %c0_108 = arith.constant 0 : index
    %c1_109 = arith.constant 1 : index
    %93 = vector.load %arg1[%c0_106, %c3_107, %c0_108, %c1_109] : memref<1x4x8x256xbf16, #tpu.memory_space<vmem>>, vector<1x1x8x128xbf16>
    %94 = vector.shape_cast %93 : vector<1x1x8x128xbf16> to vector<8x128xbf16>
    %c5_110 = arith.constant 5 : index
    %c0_111 = arith.constant 0 : index
    %c0_112 = arith.constant 0 : index
    %95 = vector.load %arg2[%c5_110, %c0_111, %c0_112] : memref<9x8x8xbf16, #tpu.memory_space<vmem>>, vector<1x8x8xbf16>
    %96 = vector.shape_cast %95 : vector<1x8x8xbf16> to vector<8x8xbf16>
    %cst_113 = arith.constant dense<0.000000e+00> : vector<8x128xf32>
    %97 = tpu.matmul %96, %94, %cst_113 {dimension_numbers = #tpu.dot_dimension_numbers<[1], [0], [0], [1], [0, 0, 1, 1], [], []>} : vector<8x8xbf16>, vector<8x128xbf16>, vector<8x128xf32> -> vector<8x128xf32>
    %98 = arith.addf %92, %97 : vector<8x128xf32>
    %c0_114 = arith.constant 0 : index
    %c1_115 = arith.constant 1 : index
    %c0_116 = arith.constant 0 : index
    %c9_117 = arith.constant 9 : index
    %99 = vector.load %arg1[%c0_114, %c1_115, %c0_116, %c9_117] : memref<1x4x8x256xbf16, #tpu.memory_space<vmem>>, vector<1x1x8x128xbf16>
    %100 = vector.shape_cast %99 : vector<1x1x8x128xbf16> to vector<8x128xbf16>
    %c6_118 = arith.constant 6 : index
    %c0_119 = arith.constant 0 : index
    %c0_120 = arith.constant 0 : index
    %101 = vector.load %arg2[%c6_118, %c0_119, %c0_120] : memref<9x8x8xbf16, #tpu.memory_space<vmem>>, vector<1x8x8xbf16>
    %102 = vector.shape_cast %101 : vector<1x8x8xbf16> to vector<8x8xbf16>
    %cst_121 = arith.constant dense<0.000000e+00> : vector<8x128xf32>
    %103 = tpu.matmul %102, %100, %cst_121 {dimension_numbers = #tpu.dot_dimension_numbers<[1], [0], [0], [1], [0, 0, 1, 1], [], []>} : vector<8x8xbf16>, vector<8x128xbf16>, vector<8x128xf32> -> vector<8x128xf32>
    %104 = arith.addf %98, %103 : vector<8x128xf32>
    %c0_122 = arith.constant 0 : index
    %c0_123 = arith.constant 0 : index
    %c0_124 = arith.constant 0 : index
    %c10_125 = arith.constant 10 : index
    %105 = vector.load %arg1[%c0_122, %c0_123, %c0_124, %c10_125] : memref<1x4x8x256xbf16, #tpu.memory_space<vmem>>, vector<1x1x8x128xbf16>
    %106 = vector.shape_cast %105 : vector<1x1x8x128xbf16> to vector<8x128xbf16>
    %c7_126 = arith.constant 7 : index
    %c0_127 = arith.constant 0 : index
    %c0_128 = arith.constant 0 : index
    %107 = vector.load %arg2[%c7_126, %c0_127, %c0_128] : memref<9x8x8xbf16, #tpu.memory_space<vmem>>, vector<1x8x8xbf16>
    %108 = vector.shape_cast %107 : vector<1x8x8xbf16> to vector<8x8xbf16>
    %cst_129 = arith.constant dense<0.000000e+00> : vector<8x128xf32>
    %109 = tpu.matmul %108, %106, %cst_129 {dimension_numbers = #tpu.dot_dimension_numbers<[1], [0], [0], [1], [0, 0, 1, 1], [], []>} : vector<8x8xbf16>, vector<8x128xbf16>, vector<8x128xf32> -> vector<8x128xf32>
    %110 = arith.addf %104, %109 : vector<8x128xf32>
    %c0_130 = arith.constant 0 : index
    %c1_131 = arith.constant 1 : index
    %c0_132 = arith.constant 0 : index
    %c10_133 = arith.constant 10 : index
    %111 = vector.load %arg1[%c0_130, %c1_131, %c0_132, %c10_133] : memref<1x4x8x256xbf16, #tpu.memory_space<vmem>>, vector<1x1x8x128xbf16>
    %112 = vector.shape_cast %111 : vector<1x1x8x128xbf16> to vector<8x128xbf16>
    %c8_134 = arith.constant 8 : index
    %c0_135 = arith.constant 0 : index
    %c0_136 = arith.constant 0 : index
    %113 = vector.load %arg2[%c8_134, %c0_135, %c0_136] : memref<9x8x8xbf16, #tpu.memory_space<vmem>>, vector<1x8x8xbf16>
    %114 = vector.shape_cast %113 : vector<1x8x8xbf16> to vector<8x8xbf16>
    %cst_137 = arith.constant dense<0.000000e+00> : vector<8x128xf32>
    %115 = tpu.matmul %114, %112, %cst_137 {dimension_numbers = #tpu.dot_dimension_numbers<[1], [0], [0], [1], [0, 0, 1, 1], [], []>} : vector<8x8xbf16>, vector<8x128xbf16>, vector<8x128xf32> -> vector<8x128xf32>
    %116 = arith.addf %110, %115 : vector<8x128xf32>
    %117 = vector.broadcast %0 : vector<8x1xf32> to vector<8x128xf32>
    %118 = arith.addf %116, %117 : vector<8x128xf32>
    %cst_138 = arith.constant 0.000000e+00 : f32
    %119 = vector.broadcast %cst_138 : f32 to vector<8x128xf32>
    %120 = arith.maximumf %118, %119 : vector<8x128xf32>
    %121 = arith.addf %61, %120 : vector<8x128xf32>
    %cst_139 = arith.constant 0.000000e+00 : f32
    %122 = vector.broadcast %cst_139 : f32 to vector<8x128xf32>
    %c0_140 = arith.constant 0 : index
    %c2_141 = arith.constant 2 : index
    %c0_142 = arith.constant 0 : index
    %c0_143 = arith.constant 0 : index
    %123 = vector.load %arg1[%c0_140, %c2_141, %c0_142, %c0_143] : memref<1x4x8x256xbf16, #tpu.memory_space<vmem>>, vector<1x1x8x128xbf16>
    %124 = vector.shape_cast %123 : vector<1x1x8x128xbf16> to vector<8x128xbf16>
    %c0_144 = arith.constant 0 : index
    %c0_145 = arith.constant 0 : index
    %c0_146 = arith.constant 0 : index
    %125 = vector.load %arg2[%c0_144, %c0_145, %c0_146] : memref<9x8x8xbf16, #tpu.memory_space<vmem>>, vector<1x8x8xbf16>
    %126 = vector.shape_cast %125 : vector<1x8x8xbf16> to vector<8x8xbf16>
    %cst_147 = arith.constant dense<0.000000e+00> : vector<8x128xf32>
    %127 = tpu.matmul %126, %124, %cst_147 {dimension_numbers = #tpu.dot_dimension_numbers<[1], [0], [0], [1], [0, 0, 1, 1], [], []>} : vector<8x8xbf16>, vector<8x128xbf16>, vector<8x128xf32> -> vector<8x128xf32>
    %128 = arith.addf %122, %127 : vector<8x128xf32>
    %c0_148 = arith.constant 0 : index
    %c3_149 = arith.constant 3 : index
    %c0_150 = arith.constant 0 : index
    %c0_151 = arith.constant 0 : index
    %129 = vector.load %arg1[%c0_148, %c3_149, %c0_150, %c0_151] : memref<1x4x8x256xbf16, #tpu.memory_space<vmem>>, vector<1x1x8x128xbf16>
    %130 = vector.shape_cast %129 : vector<1x1x8x128xbf16> to vector<8x128xbf16>
    %c1_152 = arith.constant 1 : index
    %c0_153 = arith.constant 0 : index
    %c0_154 = arith.constant 0 : index
    %131 = vector.load %arg2[%c1_152, %c0_153, %c0_154] : memref<9x8x8xbf16, #tpu.memory_space<vmem>>, vector<1x8x8xbf16>
    %132 = vector.shape_cast %131 : vector<1x8x8xbf16> to vector<8x8xbf16>
    %cst_155 = arith.constant dense<0.000000e+00> : vector<8x128xf32>
    %133 = tpu.matmul %132, %130, %cst_155 {dimension_numbers = #tpu.dot_dimension_numbers<[1], [0], [0], [1], [0, 0, 1, 1], [], []>} : vector<8x8xbf16>, vector<8x128xbf16>, vector<8x128xf32> -> vector<8x128xf32>
    %134 = arith.addf %128, %133 : vector<8x128xf32>
    %c0_156 = arith.constant 0 : index
    %c2_157 = arith.constant 2 : index
    %c0_158 = arith.constant 0 : index
    %c1_159 = arith.constant 1 : index
    %135 = vector.load %arg1[%c0_156, %c2_157, %c0_158, %c1_159] : memref<1x4x8x256xbf16, #tpu.memory_space<vmem>>, vector<1x1x8x128xbf16>
    %136 = vector.shape_cast %135 : vector<1x1x8x128xbf16> to vector<8x128xbf16>
    %c2_160 = arith.constant 2 : index
    %c0_161 = arith.constant 0 : index
    %c0_162 = arith.constant 0 : index
    %137 = vector.load %arg2[%c2_160, %c0_161, %c0_162] : memref<9x8x8xbf16, #tpu.memory_space<vmem>>, vector<1x8x8xbf16>
    %138 = vector.shape_cast %137 : vector<1x8x8xbf16> to vector<8x8xbf16>
    %cst_163 = arith.constant dense<0.000000e+00> : vector<8x128xf32>
    %139 = tpu.matmul %138, %136, %cst_163 {dimension_numbers = #tpu.dot_dimension_numbers<[1], [0], [0], [1], [0, 0, 1, 1], [], []>} : vector<8x8xbf16>, vector<8x128xbf16>, vector<8x128xf32> -> vector<8x128xf32>
    %140 = arith.addf %134, %139 : vector<8x128xf32>
    %c0_164 = arith.constant 0 : index
    %c0_165 = arith.constant 0 : index
    %c0_166 = arith.constant 0 : index
    %c9_167 = arith.constant 9 : index
    %141 = vector.load %arg1[%c0_164, %c0_165, %c0_166, %c9_167] : memref<1x4x8x256xbf16, #tpu.memory_space<vmem>>, vector<1x1x8x128xbf16>
    %142 = vector.shape_cast %141 : vector<1x1x8x128xbf16> to vector<8x128xbf16>
    %c3_168 = arith.constant 3 : index
    %c0_169 = arith.constant 0 : index
    %c0_170 = arith.constant 0 : index
    %143 = vector.load %arg2[%c3_168, %c0_169, %c0_170] : memref<9x8x8xbf16, #tpu.memory_space<vmem>>, vector<1x8x8xbf16>
    %144 = vector.shape_cast %143 : vector<1x8x8xbf16> to vector<8x8xbf16>
    %cst_171 = arith.constant dense<0.000000e+00> : vector<8x128xf32>
    %145 = tpu.matmul %144, %142, %cst_171 {dimension_numbers = #tpu.dot_dimension_numbers<[1], [0], [0], [1], [0, 0, 1, 1], [], []>} : vector<8x8xbf16>, vector<8x128xbf16>, vector<8x128xf32> -> vector<8x128xf32>
    %146 = arith.addf %140, %145 : vector<8x128xf32>
    %c0_172 = arith.constant 0 : index
    %c1_173 = arith.constant 1 : index
    %c0_174 = arith.constant 0 : index
    %c9_175 = arith.constant 9 : index
    %147 = vector.load %arg1[%c0_172, %c1_173, %c0_174, %c9_175] : memref<1x4x8x256xbf16, #tpu.memory_space<vmem>>, vector<1x1x8x128xbf16>
    %148 = vector.shape_cast %147 : vector<1x1x8x128xbf16> to vector<8x128xbf16>
    %c4_176 = arith.constant 4 : index
    %c0_177 = arith.constant 0 : index
    %c0_178 = arith.constant 0 : index
    %149 = vector.load %arg2[%c4_176, %c0_177, %c0_178] : memref<9x8x8xbf16, #tpu.memory_space<vmem>>, vector<1x8x8xbf16>
    %150 = vector.shape_cast %149 : vector<1x8x8xbf16> to vector<8x8xbf16>
    %cst_179 = arith.constant dense<0.000000e+00> : vector<8x128xf32>
    %151 = tpu.matmul %150, %148, %cst_179 {dimension_numbers = #tpu.dot_dimension_numbers<[1], [0], [0], [1], [0, 0, 1, 1], [], []>} : vector<8x8xbf16>, vector<8x128xbf16>, vector<8x128xf32> -> vector<8x128xf32>
    %152 = arith.addf %146, %151 : vector<8x128xf32>
    %c0_180 = arith.constant 0 : index
    %c0_181 = arith.constant 0 : index
    %c0_182 = arith.constant 0 : index
    %c10_183 = arith.constant 10 : index
    %153 = vector.load %arg1[%c0_180, %c0_181, %c0_182, %c10_183] : memref<1x4x8x256xbf16, #tpu.memory_space<vmem>>, vector<1x1x8x128xbf16>
    %154 = vector.shape_cast %153 : vector<1x1x8x128xbf16> to vector<8x128xbf16>
    %c5_184 = arith.constant 5 : index
    %c0_185 = arith.constant 0 : index
    %c0_186 = arith.constant 0 : index
    %155 = vector.load %arg2[%c5_184, %c0_185, %c0_186] : memref<9x8x8xbf16, #tpu.memory_space<vmem>>, vector<1x8x8xbf16>
    %156 = vector.shape_cast %155 : vector<1x8x8xbf16> to vector<8x8xbf16>
    %cst_187 = arith.constant dense<0.000000e+00> : vector<8x128xf32>
    %157 = tpu.matmul %156, %154, %cst_187 {dimension_numbers = #tpu.dot_dimension_numbers<[1], [0], [0], [1], [0, 0, 1, 1], [], []>} : vector<8x8xbf16>, vector<8x128xbf16>, vector<8x128xf32> -> vector<8x128xf32>
    %158 = arith.addf %152, %157 : vector<8x128xf32>
    %c0_188 = arith.constant 0 : index
    %c2_189 = arith.constant 2 : index
    %c0_190 = arith.constant 0 : index
    %c9_191 = arith.constant 9 : index
    %159 = vector.load %arg1[%c0_188, %c2_189, %c0_190, %c9_191] : memref<1x4x8x256xbf16, #tpu.memory_space<vmem>>, vector<1x1x8x128xbf16>
    %160 = vector.shape_cast %159 : vector<1x1x8x128xbf16> to vector<8x128xbf16>
    %c6_192 = arith.constant 6 : index
    %c0_193 = arith.constant 0 : index
    %c0_194 = arith.constant 0 : index
    %161 = vector.load %arg2[%c6_192, %c0_193, %c0_194] : memref<9x8x8xbf16, #tpu.memory_space<vmem>>, vector<1x8x8xbf16>
    %162 = vector.shape_cast %161 : vector<1x8x8xbf16> to vector<8x8xbf16>
    %cst_195 = arith.constant dense<0.000000e+00> : vector<8x128xf32>
    %163 = tpu.matmul %162, %160, %cst_195 {dimension_numbers = #tpu.dot_dimension_numbers<[1], [0], [0], [1], [0, 0, 1, 1], [], []>} : vector<8x8xbf16>, vector<8x128xbf16>, vector<8x128xf32> -> vector<8x128xf32>
    %164 = arith.addf %158, %163 : vector<8x128xf32>
    %c0_196 = arith.constant 0 : index
    %c3_197 = arith.constant 3 : index
    %c0_198 = arith.constant 0 : index
    %c9_199 = arith.constant 9 : index
    %165 = vector.load %arg1[%c0_196, %c3_197, %c0_198, %c9_199] : memref<1x4x8x256xbf16, #tpu.memory_space<vmem>>, vector<1x1x8x128xbf16>
    %166 = vector.shape_cast %165 : vector<1x1x8x128xbf16> to vector<8x128xbf16>
    %c7_200 = arith.constant 7 : index
    %c0_201 = arith.constant 0 : index
    %c0_202 = arith.constant 0 : index
    %167 = vector.load %arg2[%c7_200, %c0_201, %c0_202] : memref<9x8x8xbf16, #tpu.memory_space<vmem>>, vector<1x8x8xbf16>
    %168 = vector.shape_cast %167 : vector<1x8x8xbf16> to vector<8x8xbf16>
    %cst_203 = arith.constant dense<0.000000e+00> : vector<8x128xf32>
    %169 = tpu.matmul %168, %166, %cst_203 {dimension_numbers = #tpu.dot_dimension_numbers<[1], [0], [0], [1], [0, 0, 1, 1], [], []>} : vector<8x8xbf16>, vector<8x128xbf16>, vector<8x128xf32> -> vector<8x128xf32>
    %170 = arith.addf %164, %169 : vector<8x128xf32>
    %c0_204 = arith.constant 0 : index
    %c2_205 = arith.constant 2 : index
    %c0_206 = arith.constant 0 : index
    %c10_207 = arith.constant 10 : index
    %171 = vector.load %arg1[%c0_204, %c2_205, %c0_206, %c10_207] : memref<1x4x8x256xbf16, #tpu.memory_space<vmem>>, vector<1x1x8x128xbf16>
    %172 = vector.shape_cast %171 : vector<1x1x8x128xbf16> to vector<8x128xbf16>
    %c8_208 = arith.constant 8 : index
    %c0_209 = arith.constant 0 : index
    %c0_210 = arith.constant 0 : index
    %173 = vector.load %arg2[%c8_208, %c0_209, %c0_210] : memref<9x8x8xbf16, #tpu.memory_space<vmem>>, vector<1x8x8xbf16>
    %174 = vector.shape_cast %173 : vector<1x8x8xbf16> to vector<8x8xbf16>
    %cst_211 = arith.constant dense<0.000000e+00> : vector<8x128xf32>
    %175 = tpu.matmul %174, %172, %cst_211 {dimension_numbers = #tpu.dot_dimension_numbers<[1], [0], [0], [1], [0, 0, 1, 1], [], []>} : vector<8x8xbf16>, vector<8x128xbf16>, vector<8x128xf32> -> vector<8x128xf32>
    %176 = arith.addf %170, %175 : vector<8x128xf32>
    %177 = vector.broadcast %0 : vector<8x1xf32> to vector<8x128xf32>
    %178 = arith.addf %176, %177 : vector<8x128xf32>
    %cst_212 = arith.constant 0.000000e+00 : f32
    %179 = vector.broadcast %cst_212 : f32 to vector<8x128xf32>
    %180 = arith.maximumf %178, %179 : vector<8x128xf32>
    %181 = arith.addf %121, %180 : vector<8x128xf32>
    %cst_213 = arith.constant 0.000000e+00 : f32
    %182 = vector.broadcast %cst_213 : f32 to vector<8x128xf32>
    %c0_214 = arith.constant 0 : index
    %c3_215 = arith.constant 3 : index
    %c0_216 = arith.constant 0 : index
    %c0_217 = arith.constant 0 : index
    %183 = vector.load %arg1[%c0_214, %c3_215, %c0_216, %c0_217] : memref<1x4x8x256xbf16, #tpu.memory_space<vmem>>, vector<1x1x8x128xbf16>
    %184 = vector.shape_cast %183 : vector<1x1x8x128xbf16> to vector<8x128xbf16>
    %c0_218 = arith.constant 0 : index
    %c0_219 = arith.constant 0 : index
    %c0_220 = arith.constant 0 : index
    %185 = vector.load %arg2[%c0_218, %c0_219, %c0_220] : memref<9x8x8xbf16, #tpu.memory_space<vmem>>, vector<1x8x8xbf16>
    %186 = vector.shape_cast %185 : vector<1x8x8xbf16> to vector<8x8xbf16>
    %cst_221 = arith.constant dense<0.000000e+00> : vector<8x128xf32>
    %187 = tpu.matmul %186, %184, %cst_221 {dimension_numbers = #tpu.dot_dimension_numbers<[1], [0], [0], [1], [0, 0, 1, 1], [], []>} : vector<8x8xbf16>, vector<8x128xbf16>, vector<8x128xf32> -> vector<8x128xf32>
    %188 = arith.addf %182, %187 : vector<8x128xf32>
    %c0_222 = arith.constant 0 : index
    %c2_223 = arith.constant 2 : index
    %c0_224 = arith.constant 0 : index
    %c1_225 = arith.constant 1 : index
    %189 = vector.load %arg1[%c0_222, %c2_223, %c0_224, %c1_225] : memref<1x4x8x256xbf16, #tpu.memory_space<vmem>>, vector<1x1x8x128xbf16>
    %190 = vector.shape_cast %189 : vector<1x1x8x128xbf16> to vector<8x128xbf16>
    %c1_226 = arith.constant 1 : index
    %c0_227 = arith.constant 0 : index
    %c0_228 = arith.constant 0 : index
    %191 = vector.load %arg2[%c1_226, %c0_227, %c0_228] : memref<9x8x8xbf16, #tpu.memory_space<vmem>>, vector<1x8x8xbf16>
    %192 = vector.shape_cast %191 : vector<1x8x8xbf16> to vector<8x8xbf16>
    %cst_229 = arith.constant dense<0.000000e+00> : vector<8x128xf32>
    %193 = tpu.matmul %192, %190, %cst_229 {dimension_numbers = #tpu.dot_dimension_numbers<[1], [0], [0], [1], [0, 0, 1, 1], [], []>} : vector<8x8xbf16>, vector<8x128xbf16>, vector<8x128xf32> -> vector<8x128xf32>
    %194 = arith.addf %188, %193 : vector<8x128xf32>
    %c0_230 = arith.constant 0 : index
    %c3_231 = arith.constant 3 : index
    %c0_232 = arith.constant 0 : index
    %c1_233 = arith.constant 1 : index
    %195 = vector.load %arg1[%c0_230, %c3_231, %c0_232, %c1_233] : memref<1x4x8x256xbf16, #tpu.memory_space<vmem>>, vector<1x1x8x128xbf16>
    %196 = vector.shape_cast %195 : vector<1x1x8x128xbf16> to vector<8x128xbf16>
    %c2_234 = arith.constant 2 : index
    %c0_235 = arith.constant 0 : index
    %c0_236 = arith.constant 0 : index
    %197 = vector.load %arg2[%c2_234, %c0_235, %c0_236] : memref<9x8x8xbf16, #tpu.memory_space<vmem>>, vector<1x8x8xbf16>
    %198 = vector.shape_cast %197 : vector<1x8x8xbf16> to vector<8x8xbf16>
    %cst_237 = arith.constant dense<0.000000e+00> : vector<8x128xf32>
    %199 = tpu.matmul %198, %196, %cst_237 {dimension_numbers = #tpu.dot_dimension_numbers<[1], [0], [0], [1], [0, 0, 1, 1], [], []>} : vector<8x8xbf16>, vector<8x128xbf16>, vector<8x128xf32> -> vector<8x128xf32>
    %200 = arith.addf %194, %199 : vector<8x128xf32>
    %c0_238 = arith.constant 0 : index
    %c1_239 = arith.constant 1 : index
    %c0_240 = arith.constant 0 : index
    %c9_241 = arith.constant 9 : index
    %201 = vector.load %arg1[%c0_238, %c1_239, %c0_240, %c9_241] : memref<1x4x8x256xbf16, #tpu.memory_space<vmem>>, vector<1x1x8x128xbf16>
    %202 = vector.shape_cast %201 : vector<1x1x8x128xbf16> to vector<8x128xbf16>
    %c3_242 = arith.constant 3 : index
    %c0_243 = arith.constant 0 : index
    %c0_244 = arith.constant 0 : index
    %203 = vector.load %arg2[%c3_242, %c0_243, %c0_244] : memref<9x8x8xbf16, #tpu.memory_space<vmem>>, vector<1x8x8xbf16>
    %204 = vector.shape_cast %203 : vector<1x8x8xbf16> to vector<8x8xbf16>
    %cst_245 = arith.constant dense<0.000000e+00> : vector<8x128xf32>
    %205 = tpu.matmul %204, %202, %cst_245 {dimension_numbers = #tpu.dot_dimension_numbers<[1], [0], [0], [1], [0, 0, 1, 1], [], []>} : vector<8x8xbf16>, vector<8x128xbf16>, vector<8x128xf32> -> vector<8x128xf32>
    %206 = arith.addf %200, %205 : vector<8x128xf32>
    %c0_246 = arith.constant 0 : index
    %c0_247 = arith.constant 0 : index
    %c0_248 = arith.constant 0 : index
    %c10_249 = arith.constant 10 : index
    %207 = vector.load %arg1[%c0_246, %c0_247, %c0_248, %c10_249] : memref<1x4x8x256xbf16, #tpu.memory_space<vmem>>, vector<1x1x8x128xbf16>
    %208 = vector.shape_cast %207 : vector<1x1x8x128xbf16> to vector<8x128xbf16>
    %c4_250 = arith.constant 4 : index
    %c0_251 = arith.constant 0 : index
    %c0_252 = arith.constant 0 : index
    %209 = vector.load %arg2[%c4_250, %c0_251, %c0_252] : memref<9x8x8xbf16, #tpu.memory_space<vmem>>, vector<1x8x8xbf16>
    %210 = vector.shape_cast %209 : vector<1x8x8xbf16> to vector<8x8xbf16>
    %cst_253 = arith.constant dense<0.000000e+00> : vector<8x128xf32>
    %211 = tpu.matmul %210, %208, %cst_253 {dimension_numbers = #tpu.dot_dimension_numbers<[1], [0], [0], [1], [0, 0, 1, 1], [], []>} : vector<8x8xbf16>, vector<8x128xbf16>, vector<8x128xf32> -> vector<8x128xf32>
    %212 = arith.addf %206, %211 : vector<8x128xf32>
    %c0_254 = arith.constant 0 : index
    %c1_255 = arith.constant 1 : index
    %c0_256 = arith.constant 0 : index
    %c10_257 = arith.constant 10 : index
    %213 = vector.load %arg1[%c0_254, %c1_255, %c0_256, %c10_257] : memref<1x4x8x256xbf16, #tpu.memory_space<vmem>>, vector<1x1x8x128xbf16>
    %214 = vector.shape_cast %213 : vector<1x1x8x128xbf16> to vector<8x128xbf16>
    %c5_258 = arith.constant 5 : index
    %c0_259 = arith.constant 0 : index
    %c0_260 = arith.constant 0 : index
    %215 = vector.load %arg2[%c5_258, %c0_259, %c0_260] : memref<9x8x8xbf16, #tpu.memory_space<vmem>>, vector<1x8x8xbf16>
    %216 = vector.shape_cast %215 : vector<1x8x8xbf16> to vector<8x8xbf16>
    %cst_261 = arith.constant dense<0.000000e+00> : vector<8x128xf32>
    %217 = tpu.matmul %216, %214, %cst_261 {dimension_numbers = #tpu.dot_dimension_numbers<[1], [0], [0], [1], [0, 0, 1, 1], [], []>} : vector<8x8xbf16>, vector<8x128xbf16>, vector<8x128xf32> -> vector<8x128xf32>
    %218 = arith.addf %212, %217 : vector<8x128xf32>
    %c0_262 = arith.constant 0 : index
    %c3_263 = arith.constant 3 : index
    %c0_264 = arith.constant 0 : index
    %c9_265 = arith.constant 9 : index
    %219 = vector.load %arg1[%c0_262, %c3_263, %c0_264, %c9_265] : memref<1x4x8x256xbf16, #tpu.memory_space<vmem>>, vector<1x1x8x128xbf16>
    %220 = vector.shape_cast %219 : vector<1x1x8x128xbf16> to vector<8x128xbf16>
    %c6_266 = arith.constant 6 : index
    %c0_267 = arith.constant 0 : index
    %c0_268 = arith.constant 0 : index
    %221 = vector.load %arg2[%c6_266, %c0_267, %c0_268] : memref<9x8x8xbf16, #tpu.memory_space<vmem>>, vector<1x8x8xbf16>
    %222 = vector.shape_cast %221 : vector<1x8x8xbf16> to vector<8x8xbf16>
    %cst_269 = arith.constant dense<0.000000e+00> : vector<8x128xf32>
    %223 = tpu.matmul %222, %220, %cst_269 {dimension_numbers = #tpu.dot_dimension_numbers<[1], [0], [0], [1], [0, 0, 1, 1], [], []>} : vector<8x8xbf16>, vector<8x128xbf16>, vector<8x128xf32> -> vector<8x128xf32>
    %224 = arith.addf %218, %223 : vector<8x128xf32>
    %c0_270 = arith.constant 0 : index
    %c2_271 = arith.constant 2 : index
    %c0_272 = arith.constant 0 : index
    %c10_273 = arith.constant 10 : index
    %225 = vector.load %arg1[%c0_270, %c2_271, %c0_272, %c10_273] : memref<1x4x8x256xbf16, #tpu.memory_space<vmem>>, vector<1x1x8x128xbf16>
    %226 = vector.shape_cast %225 : vector<1x1x8x128xbf16> to vector<8x128xbf16>
    %c7_274 = arith.constant 7 : index
    %c0_275 = arith.constant 0 : index
    %c0_276 = arith.constant 0 : index
    %227 = vector.load %arg2[%c7_274, %c0_275, %c0_276] : memref<9x8x8xbf16, #tpu.memory_space<vmem>>, vector<1x8x8xbf16>
    %228 = vector.shape_cast %227 : vector<1x8x8xbf16> to vector<8x8xbf16>
    %cst_277 = arith.constant dense<0.000000e+00> : vector<8x128xf32>
    %229 = tpu.matmul %228, %226, %cst_277 {dimension_numbers = #tpu.dot_dimension_numbers<[1], [0], [0], [1], [0, 0, 1, 1], [], []>} : vector<8x8xbf16>, vector<8x128xbf16>, vector<8x128xf32> -> vector<8x128xf32>
    %230 = arith.addf %224, %229 : vector<8x128xf32>
    %c0_278 = arith.constant 0 : index
    %c3_279 = arith.constant 3 : index
    %c0_280 = arith.constant 0 : index
    %c10_281 = arith.constant 10 : index
    %231 = vector.load %arg1[%c0_278, %c3_279, %c0_280, %c10_281] : memref<1x4x8x256xbf16, #tpu.memory_space<vmem>>, vector<1x1x8x128xbf16>
    %232 = vector.shape_cast %231 : vector<1x1x8x128xbf16> to vector<8x128xbf16>
    %c8_282 = arith.constant 8 : index
    %c0_283 = arith.constant 0 : index
    %c0_284 = arith.constant 0 : index
    %233 = vector.load %arg2[%c8_282, %c0_283, %c0_284] : memref<9x8x8xbf16, #tpu.memory_space<vmem>>, vector<1x8x8xbf16>
    %234 = vector.shape_cast %233 : vector<1x8x8xbf16> to vector<8x8xbf16>
    %cst_285 = arith.constant dense<0.000000e+00> : vector<8x128xf32>
    %235 = tpu.matmul %234, %232, %cst_285 {dimension_numbers = #tpu.dot_dimension_numbers<[1], [0], [0], [1], [0, 0, 1, 1], [], []>} : vector<8x8xbf16>, vector<8x128xbf16>, vector<8x128xf32> -> vector<8x128xf32>
    %236 = arith.addf %230, %235 : vector<8x128xf32>
    %237 = vector.broadcast %0 : vector<8x1xf32> to vector<8x128xf32>
    %238 = arith.addf %236, %237 : vector<8x128xf32>
    %cst_286 = arith.constant 0.000000e+00 : f32
    %239 = vector.broadcast %cst_286 : f32 to vector<8x128xf32>
    %240 = arith.maximumf %238, %239 : vector<8x128xf32>
    %241 = arith.addf %181, %240 : vector<8x128xf32>
    %cst_287 = arith.constant 2.500000e-01 : f32
    %242 = vector.broadcast %cst_287 : f32 to vector<8x128xf32>
    %243 = arith.mulf %241, %242 : vector<8x128xf32>
    %c0_288 = arith.constant 0 : index
    %c3_289 = arith.constant 3 : index
    %c0_290 = arith.constant 0 : index
    %c0_291 = arith.constant 0 : index
    %244 = vector.load %arg1[%c0_288, %c3_289, %c0_290, %c0_291] : memref<1x4x8x256xbf16, #tpu.memory_space<vmem>>, vector<1x1x8x128xbf16>
    %245 = vector.shape_cast %244 : vector<1x1x8x128xbf16> to vector<8x128xbf16>
    %246 = arith.extf %245 : vector<8x128xbf16> to vector<8x128xf32>
    %c0_292 = arith.constant 0 : index
    %c2_293 = arith.constant 2 : index
    %c0_294 = arith.constant 0 : index
    %c1_295 = arith.constant 1 : index
    %247 = vector.load %arg1[%c0_292, %c2_293, %c0_294, %c1_295] : memref<1x4x8x256xbf16, #tpu.memory_space<vmem>>, vector<1x1x8x128xbf16>
    %248 = vector.shape_cast %247 : vector<1x1x8x128xbf16> to vector<8x128xbf16>
    %249 = arith.extf %248 : vector<8x128xbf16> to vector<8x128xf32>
    %250 = arith.addf %246, %249 : vector<8x128xf32>
    %c0_296 = arith.constant 0 : index
    %c1_297 = arith.constant 1 : index
    %c0_298 = arith.constant 0 : index
    %c9_299 = arith.constant 9 : index
    %251 = vector.load %arg1[%c0_296, %c1_297, %c0_298, %c9_299] : memref<1x4x8x256xbf16, #tpu.memory_space<vmem>>, vector<1x1x8x128xbf16>
    %252 = vector.shape_cast %251 : vector<1x1x8x128xbf16> to vector<8x128xbf16>
    %253 = arith.extf %252 : vector<8x128xbf16> to vector<8x128xf32>
    %254 = arith.addf %250, %253 : vector<8x128xf32>
    %c0_300 = arith.constant 0 : index
    %c0_301 = arith.constant 0 : index
    %c0_302 = arith.constant 0 : index
    %c10_303 = arith.constant 10 : index
    %255 = vector.load %arg1[%c0_300, %c0_301, %c0_302, %c10_303] : memref<1x4x8x256xbf16, #tpu.memory_space<vmem>>, vector<1x1x8x128xbf16>
    %256 = vector.shape_cast %255 : vector<1x1x8x128xbf16> to vector<8x128xbf16>
    %257 = arith.extf %256 : vector<8x128xbf16> to vector<8x128xf32>
    %258 = arith.addf %254, %257 : vector<8x128xf32>
    %cst_304 = arith.constant 2.500000e-01 : f32
    %259 = vector.broadcast %cst_304 : f32 to vector<8x128xf32>
    %260 = arith.mulf %258, %259 : vector<8x128xf32>
    %c0_305 = arith.constant 0 : index
    %c0_306 = arith.constant 0 : index
    %261 = vector.load %arg4[%c0_305, %c0_306] : memref<8x8xbf16, #tpu.memory_space<vmem>>, vector<8x8xbf16>
    %262 = arith.truncf %243 : vector<8x128xf32> to vector<8x128xbf16>
    %cst_307 = arith.constant dense<0.000000e+00> : vector<8x128xf32>
    %263 = tpu.matmul %261, %262, %cst_307 {dimension_numbers = #tpu.dot_dimension_numbers<[1], [0], [0], [1], [0, 0, 1, 1], [], []>} : vector<8x8xbf16>, vector<8x128xbf16>, vector<8x128xf32> -> vector<8x128xf32>
    %c0_308 = arith.constant 0 : index
    %c0_309 = arith.constant 0 : index
    %264 = vector.load %arg5[%c0_308, %c0_309] : memref<8x8xbf16, #tpu.memory_space<vmem>>, vector<8x8xbf16>
    %265 = arith.truncf %260 : vector<8x128xf32> to vector<8x128xbf16>
    %cst_310 = arith.constant dense<0.000000e+00> : vector<8x128xf32>
    %266 = tpu.matmul %264, %265, %cst_310 {dimension_numbers = #tpu.dot_dimension_numbers<[1], [0], [0], [1], [0, 0, 1, 1], [], []>} : vector<8x8xbf16>, vector<8x128xbf16>, vector<8x128xf32> -> vector<8x128xf32>
    %267 = arith.addf %263, %266 : vector<8x128xf32>
    %c0_311 = arith.constant 0 : index
    %c0_312 = arith.constant 0 : index
    %268 = vector.load %arg6[%c0_311, %c0_312] : memref<8x1xf32, #tpu.memory_space<vmem>>, vector<8x1xf32>
    %269 = vector.broadcast %268 : vector<8x1xf32> to vector<8x128xf32>
    %270 = arith.addf %267, %269 : vector<8x128xf32>
    %c0_313 = arith.constant 0 : index
    %c0_314 = arith.constant 0 : index
    %c0_315 = arith.constant 0 : index
    %271 = vector.load %arg7[%c0_313, %c0_314, %c0_315] : memref<1x8x128xf32, #tpu.memory_space<vmem>>, vector<1x8x128xf32>
    %272 = vector.shape_cast %271 : vector<1x8x128xf32> to vector<8x128xf32>
    %273 = vector.shape_cast %270 : vector<8x128xf32> to vector<1x8x128xf32>
    tpu.vector_store %arg7[%c0_313, %c0_314, %c0_315], %273 {strides = array<i32>} : memref<1x8x128xf32, #tpu.memory_space<vmem>>, vector<1x8x128xf32>,
    return
  }
  func.func @transform_0(%arg0: i32) -> (i32, i32, i32, i32) {
    %c0_i32 = arith.constant 0 : i32
    %c0_i32_0 = arith.constant 0 : i32
    %c0_i32_1 = arith.constant 0 : i32
    %c0_i32_2 = arith.constant 0 : i32
    return %arg0, %c0_i32, %c0_i32_0, %c0_i32_1 : i32, i32, i32, i32
  }
  func.func @transform_1(%arg0: i32) -> (i32, i32, i32) {
    %c0_i32 = arith.constant 0 : i32
    %c0_i32_0 = arith.constant 0 : i32
    %c0_i32_1 = arith.constant 0 : i32
    %c0_i32_2 = arith.constant 0 : i32
    return %c0_i32, %c0_i32_0, %c0_i32_1 : i32, i32, i32
  }
  func.func @transform_2(%arg0: i32) -> (i32, i32) {
    %c0_i32 = arith.constant 0 : i32
    %c0_i32_0 = arith.constant 0 : i32
    %c0_i32_1 = arith.constant 0 : i32
    return %c0_i32, %c0_i32_0 : i32, i32
  }
  func.func @transform_3(%arg0: i32) -> (i32, i32) {
    %c0_i32 = arith.constant 0 : i32
    %c0_i32_0 = arith.constant 0 : i32
    %c0_i32_1 = arith.constant 0 : i32
    return %c0_i32, %c0_i32_0 : i32, i32
  }
  func.func @transform_4(%arg0: i32) -> (i32, i32) {
    %c0_i32 = arith.constant 0 : i32
    %c0_i32_0 = arith.constant 0 : i32
    %c0_i32_1 = arith.constant 0 : i32
    return %c0_i32, %c0_i32_0 : i32, i32
  }
  func.func @transform_5(%arg0: i32) -> (i32, i32) {
    %c0_i32 = arith.constant 0 : i32
    %c0_i32_0 = arith.constant 0 : i32
    %c0_i32_1 = arith.constant 0 : i32
    return %c0_i32, %c0_i32_0 : i32, i32
  }
  func.func @transform_6(%arg0: i32) -> (i32, i32, i32) {
    %c0_i32 = arith.constant 0 : i32
    %c0_i32_0 = arith.constant 0 : i32
    %c0_i32_1 = arith.constant 0 : i32
    return %arg0, %c0_i32, %c0_i32_0 : i32, i32, i32
  }
}

</mosaic_0001>

<llo_original>
// kernel: disc_block1.1
$region0: #{disc_block1.1}
  #allocation0 [shape = 'u32[]', space=smem, size = 0x4, offset = 0x4, fixed_abs, tag = 'smem constant byte address 0x4 - core index']
  #allocation1 [shape = 'u32[144,128]{1,0:T(1,128)}', space=vmem, size = 0x12000, scoped, tag = 'internal scratch']
  %s0 = inlined_call_operand.vmem [shape: bf16[2,4,8,256], index: 0, kind: input, shape index: {}]
  %s1 = inlined_call_operand.vmem [shape: bf16[9,8,8], index: 1, kind: input, shape index: {}]
  %s2 = inlined_call_operand.vmem [shape: f32[8,1], index: 2, kind: input, shape index: {}]
  %s3 = inlined_call_operand.vmem [shape: bf16[8,8], index: 3, kind: input, shape index: {}]
  %s4 = inlined_call_operand.vmem [shape: bf16[8,8], index: 4, kind: input, shape index: {}]
  %s5 = inlined_call_operand.vmem [shape: f32[8,1], index: 5, kind: input, shape index: {}]
  %s6 = inlined_call_operand.vmem [shape: f32[2,8,128], index: 6, kind: output, shape index: {}]
  %s7 = sld [smem:[#allocation0]]
  $region57: #{disc_block1.1} parent=0
    _
  %s9 = ssub.s32 1, %s7
  %s10 = scalar_select 0, %s9, %s7
  loop: start=0, step=1, limit=4
  $region2: #{disc_block1.1} parent=0 // loop_pre_header
    _
  $region3: #{disc_block1.1} parent=0 // loop_header
    %s12 = sphi 0, %s16
    %p13 = scmp.ge.s32.totalorder %s12, 4
    %s22 = sphi 0, %s24
    %s25 = sphi 0, %s22
    %s26 = sphi 0, %s25
    %s42 = sphi 0, %s26
    %s46 = sphi 0, %s46
    %s48 = sphi 0, %s46
    %s49 = sphi 0, %s48
    %s63 = sphi 0, %s49
    %s67 = sphi 0, %s67
    %s69 = sphi 0, %s67
    %s70 = sphi 0, %s69
    %s84 = sphi 0, %s70
    %s88 = sphi 0, %s88
    %s90 = sphi 0, %s88
    %s91 = sphi 0, %s90
    %s105 = sphi 0, %s91
    %s109 = sphi 0, %s109
    %s111 = sphi 0, %s109
    %s112 = sphi 0, %s111
    %s126 = sphi 0, %s112
    %s130 = sphi 0, %s130
    %s132 = sphi 0, %s130
    %s133 = sphi 0, %s132
    %s147 = sphi 0, %s133
    %s153 = sphi 0, %s155
    %s156 = sphi 0, %s153
    %s157 = sphi 0, %s156
    %s173 = sphi 0, %s157
  $region4: #{disc_block1.1} parent=0 // loop_header_branch
    %15 = sbr.rel (%p13) target = $region8
  $region5: #{disc_block1.1} parent=0 // loop_body
    %s17 = ssub.s32 %s12, 1
    %s18 = ssub.s32 %s12, 2
    %s19 = sadd.s32 %s12, 1
    %s20 = ssub.s32 %s12, %s19
    %p21 = scmp.eq.s32.totalorder %s20, 0
    %s23 = sadd.s32 %s22, 1
    %s24 = scalar_select %p21, %s22, %s23
    %p27 = pneg %p21
    %p28 = scmp.eq.s32.totalorder %s12, 1
    %p29 = por %p27, %p28
    %p30 = scmp.ne.s32.totalorder %s22, %s25
    %p31 = scmp.eq.s32.totalorder %s12, 0
    %p32 = por %p30, %p31
    %p33 = scmp.ne.s32.totalorder %s22, %s25
    %p34 = scmp.eq.s32.totalorder %s17, 1
    %p35 = por %p33, %p34
    %p36 = scmp.ne.s32.totalorder %s25, %s26
    %p37 = scmp.eq.s32.totalorder %s17, 0
    %p38 = por %p36, %p37
    %p39 = scmp.ne.s32.totalorder %s25, %s26
    %p40 = scmp.eq.s32.totalorder %s18, 1
    %p41 = por %p39, %p40
    %p43 = scmp.ne.s32.totalorder %s26, %s42
    %p44 = scmp.eq.s32.totalorder %s18, 0
    %p45 = por %p43, %p44
    %s47 = sadd.s32 %s46, 1
    %p50 = scmp.eq.s32.totalorder %s12, 1
    %p51 = scmp.ne.s32.totalorder %s46, %s48
    %p52 = scmp.eq.s32.totalorder %s12, 0
    %p53 = por %p51, %p52
    %p54 = scmp.ne.s32.totalorder %s46, %s48
    %p55 = scmp.eq.s32.totalorder %s17, 1
    %p56 = por %p54, %p55
    %p57 = scmp.ne.s32.totalorder %s48, %s49
    %p58 = scmp.eq.s32.totalorder %s17, 0
    %p59 = por %p57, %p58
    %p60 = scmp.ne.s32.totalorder %s48, %s49
    %p61 = scmp.eq.s32.totalorder %s18, 1
    %p62 = por %p60, %p61
    %p64 = scmp.ne.s32.totalorder %s49, %s63
    %p65 = scmp.eq.s32.totalorder %s18, 0
    %p66 = por %p64, %p65
    %s68 = sadd.s32 %s67, 1
    %p71 = scmp.eq.s32.totalorder %s12, 1
    %p72 = scmp.ne.s32.totalorder %s67, %s69
    %p73 = scmp.eq.s32.totalorder %s12, 0
    %p74 = por %p72, %p73
    %p75 = scmp.ne.s32.totalorder %s67, %s69
    %p76 = scmp.eq.s32.totalorder %s17, 1
    %p77 = por %p75, %p76
    %p78 = scmp.ne.s32.totalorder %s69, %s70
    %p79 = scmp.eq.s32.totalorder %s17, 0
    %p80 = por %p78, %p79
    %p81 = scmp.ne.s32.totalorder %s69, %s70
    %p82 = scmp.eq.s32.totalorder %s18, 1
    %p83 = por %p81, %p82
    %p85 = scmp.ne.s32.totalorder %s70, %s84
    %p86 = scmp.eq.s32.totalorder %s18, 0
    %p87 = por %p85, %p86
    %s89 = sadd.s32 %s88, 1
    %p92 = scmp.eq.s32.totalorder %s12, 1
    %p93 = scmp.ne.s32.totalorder %s88, %s90
    %p94 = scmp.eq.s32.totalorder %s12, 0
    %p95 = por %p93, %p94
    %p96 = scmp.ne.s32.totalorder %s88, %s90
    %p97 = scmp.eq.s32.totalorder %s17, 1
    %p98 = por %p96, %p97
    %p99 = scmp.ne.s32.totalorder %s90, %s91
    %p100 = scmp.eq.s32.totalorder %s17, 0
    %p101 = por %p99, %p100
    %p102 = scmp.ne.s32.totalorder %s90, %s91
    %p103 = scmp.eq.s32.totalorder %s18, 1
    %p104 = por %p102, %p103
    %p106 = scmp.ne.s32.totalorder %s91, %s105
    %p107 = scmp.eq.s32.totalorder %s18, 0
    %p108 = por %p106, %p107
    %s110 = sadd.s32 %s109, 1
    %p113 = scmp.eq.s32.totalorder %s12, 1
    %p114 = scmp.ne.s32.totalorder %s109, %s111
    %p115 = scmp.eq.s32.totalorder %s12, 0
    %p116 = por %p114, %p115
    %p117 = scmp.ne.s32.totalorder %s109, %s111
    %p118 = scmp.eq.s32.totalorder %s17, 1
    %p119 = por %p117, %p118
    %p120 = scmp.ne.s32.totalorder %s111, %s112
    %p121 = scmp.eq.s32.totalorder %s17, 0
    %p122 = por %p120, %p121
    %p123 = scmp.ne.s32.totalorder %s111, %s112
    %p124 = scmp.eq.s32.totalorder %s18, 1
    %p125 = por %p123, %p124
    %p127 = scmp.ne.s32.totalorder %s112, %s126
    %p128 = scmp.eq.s32.totalorder %s18, 0
    %p129 = por %p127, %p128
    %s131 = sadd.s32 %s130, 1
    %p134 = scmp.eq.s32.totalorder %s12, 1
    %p135 = scmp.ne.s32.totalorder %s130, %s132
    %p136 = scmp.eq.s32.totalorder %s12, 0
    %p137 = por %p135, %p136
    %p138 = scmp.ne.s32.totalorder %s130, %s132
    %p139 = scmp.eq.s32.totalorder %s17, 1
    %p140 = por %p138, %p139
    %p141 = scmp.ne.s32.totalorder %s132, %s133
    %p142 = scmp.eq.s32.totalorder %s17, 0
    %p143 = por %p141, %p142
    %p144 = scmp.ne.s32.totalorder %s132, %s133
    %p145 = scmp.eq.s32.totalorder %s18, 1
    %p146 = por %p144, %p145
    %p148 = scmp.ne.s32.totalorder %s133, %s147
    %p149 = scmp.eq.s32.totalorder %s18, 0
    %p150 = por %p148, %p149
    %s151 = ssub.s32 %s12, %s19
    %p152 = scmp.eq.s32.totalorder %s151, 0
    %s154 = sadd.s32 %s153, 1
    %s155 = scalar_select %p152, %s153, %s154
    %p158 = pneg %p152
    %p159 = scmp.eq.s32.totalorder %s12, 1
    %p160 = por %p158, %p159
    %p161 = scmp.ne.s32.totalorder %s153, %s156
    %p162 = scmp.eq.s32.totalorder %s12, 0
    %p163 = por %p161, %p162
    %p164 = scmp.ne.s32.totalorder %s153, %s156
    %p165 = scmp.eq.s32.totalorder %s17, 1
    %p166 = por %p164, %p165
    %p167 = scmp.ne.s32.totalorder %s156, %s157
    %p168 = scmp.eq.s32.totalorder %s17, 0
    %p169 = por %p167, %p168
    %p170 = scmp.ne.s32.totalorder %s156, %s157
    %p171 = scmp.eq.s32.totalorder %s18, 1
    %p172 = por %p170, %p171
    %p174 = scmp.ne.s32.totalorder %s157, %s173
    %p175 = scmp.eq.s32.totalorder %s18, 0
    %p176 = por %p174, %p175
    %p177 = scmp.le.s32.totalorder 1, %s12
    %p178 = scmp.lt.s32.totalorder %s12, 3
    %p179 = pnand %p177, %p178
    %p180 = pneg %p179
    // Predicated region
    $region9: #{disc_block1.1} parent=5 // pred_check
      _
    $region10: #{disc_block1.1} parent=5 // pred_check_branch
      %182 = sbr.rel (%p179) target = $region12
    $region11: #{disc_block1.1} parent=5 // pred_region
      %s183 = ssub.s32 %s12, 1
      // Predicated region
      $region13: #{disc_block1.1} parent=11 // pred_check
        %p184 = pneg %p59
      $region14: #{disc_block1.1} parent=11 // pred_check_branch
        %186 = sbr.rel (%p184) target = $region16
      $region15: #{disc_block1.1} parent=11 // pred_region
        _
      $region16: #{disc_block1.1} parent=11 // pred_fallthru
        _
      // Predicated region
      $region17: #{disc_block1.1} parent=11 // pred_check
        %p187 = pneg %p80
      $region18: #{disc_block1.1} parent=11 // pred_check_branch
        %189 = sbr.rel (%p187) target = $region20
      $region19: #{disc_block1.1} parent=11 // pred_region
        _
      $region20: #{disc_block1.1} parent=11 // pred_fallthru
        _
      // Predicated region
      $region21: #{disc_block1.1} parent=11 // pred_check
        %p190 = pneg %p101
      $region22: #{disc_block1.1} parent=11 // pred_check_branch
        %192 = sbr.rel (%p190) target = $region24
      $region23: #{disc_block1.1} parent=11 // pred_region
        _
      $region24: #{disc_block1.1} parent=11 // pred_fallthru
        _
      // Predicated region
      $region25: #{disc_block1.1} parent=11 // pred_check
        %p193 = pneg %p122
      $region26: #{disc_block1.1} parent=11 // pred_check_branch
        %195 = sbr.rel (%p193) target = $region28
      $region27: #{disc_block1.1} parent=11 // pred_region
        _
      $region28: #{disc_block1.1} parent=11 // pred_fallthru
        _
      // Predicated region
      $region29: #{disc_block1.1} parent=11 // pred_check
        %p196 = pneg %p143
      $region30: #{disc_block1.1} parent=11 // pred_check_branch
        %198 = sbr.rel (%p196) target = $region32
      $region31: #{disc_block1.1} parent=11 // pred_region
        _
      $region32: #{disc_block1.1} parent=11 // pred_fallthru
        _
    $region12: #{disc_block1.1} parent=5 // pred_fallthru
      _
    %p199 = scmp.lt.s32.totalorder %s12, 2
    // Predicated region
    $region33: #{disc_block1.1} parent=5 // pred_check
      %p200 = pneg %p199
    $region34: #{disc_block1.1} parent=5 // pred_check_branch
      %202 = sbr.rel (%p200) target = $region36
    $region35: #{disc_block1.1} parent=5 // pred_region
      // Predicated region
      $region37: #{disc_block1.1} parent=35 // pred_check
        %p203 = pneg %p32
      $region38: #{disc_block1.1} parent=35 // pred_check_branch
        %205 = sbr.rel (%p203) target = $region40
      $region39: #{disc_block1.1} parent=35 // pred_region
        %p206 = scmp.lt.s32.totalorder %s12, 1
        %s207 = scalar_select %p206, %s12, 1
        %s208 = smul.addr %s207, 8
        %s209 = smul.addr %s208, 4
        %s210 = scalar_lea.vmem %s0, %s209
      $region40: #{disc_block1.1} parent=35 // pred_fallthru
        _
    $region36: #{disc_block1.1} parent=5 // pred_fallthru
      _
    %p211 = scmp.le.s32.totalorder 1, %s12
    %p212 = scmp.lt.s32.totalorder %s12, 3
    %p213 = pnand %p211, %p212
    %p214 = pneg %p213
    // Predicated region
    $region41: #{disc_block1.1} parent=5 // pred_check
      _
    $region42: #{disc_block1.1} parent=5 // pred_check_branch
      %216 = sbr.rel (%p213) target = $region44
    $region43: #{disc_block1.1} parent=5 // pred_region
      %s217 = ssub.s32 %s12, 1
      %p218 = scmp.lt.s32.totalorder %s17, 1
      %s219 = scalar_select %p218, %s17, 1
      %s220 = smul.addr %s219, 8
      %s221 = smul.addr %s220, 4
      %s222 = scalar_lea.vmem %s0, %s221
      %p223 = pneg %p38
      %p224 = pneg %p35
      %p225 = pneg %p59
      %p226 = pneg %p56
      %p227 = pneg %p80
      %p228 = pneg %p77
      %p229 = pneg %p101
      %p230 = pneg %p98
      %p231 = pneg %p122
      %p232 = pneg %p119
      %p233 = pneg %p143
      %p234 = pneg %p140
      %p235 = pneg %p169
      %p236 = pneg %p166
      %p237 = scmp.lt.s32.totalorder %s17, 1
      %s238 = scalar_select %p237, %s17, 1
      %s239 = smul.addr %s238, 8
      %s240 = scalar_lea.vmem %s6, %s239
      %p241 = scmp.lt.s32.totalorder %s17, 1
      %s242 = scalar_select %p241, %s17, 1
      %s243 = smul.addr %s242, 8
      %s244 = smul.addr %s243, 4
      %s245 = scalar_lea.vmem %s0, %s244
      %p246 = scmp.lt.s32.totalorder %s17, 1
      %s247 = scalar_select %p246, %s17, 1
      %s248 = smul.addr %s247, 8
      %s249 = scalar_lea.vmem %s6, %s248
      %v251 = vld [vmem:[%s2] sm:$0xff]
      %v252 = vld [vmem:[%s245] sm:$0xf]
      %v253 = vld [vmem:[%s1] sm:$0xf]
      %s254 = scalar_lea.vmem %s245, 8
      %v255 = vld [vmem:[%s254] sm:$0xf]
      %s256 = scalar_lea.vmem %s1, 4
      %v257 = vld [vmem:[%s256] sm:$0xf]
      %vm258 = vcmask 64512
      %v260 = vsel %vm258, %v257, 0
      %vm262 = vcmask 1043456
      %v264 = vsel %vm262, %v255, 0
      %266 = vmatprep.subr.bf16.mxu0 0
      %267 = vmatpush1.bf16.msra.mxu0 0
      %268 = vmatprep.subr.bf16.mxu0 0
      %269 = vmatpush1.bf16.msra.mxu0 0
      %270 = vmatprep.subr.bf16.mxu0 0
      %271 = vmatpush1.bf16.msra.mxu0 0
      %272 = vmatprep.subr.bf16.mxu0 0
      %273 = vmatpush1.bf16.msra.mxu0 0
      %274 = vmatprep.subr.bf16.mxu0 0
      %275 = vmatpush1.bf16.msra.mxu0 0
      %276 = vmatprep.subr.bf16.mxu0 0
      %277 = vmatpush1.bf16.msra.mxu0 0
      %278 = vmatprep.subr.bf16.mxu0 0
      %279 = vmatpush1.bf16.msra.mxu0 0
      %280 = vmatprep.subr.bf16.mxu0 0
      %281 = vmatpush1.bf16.msra.mxu0 %v264
      %282 = vmatprep.subr.bf16.mxu0 0
      %283 = vmatpush2.bf16.msra.mxu0 0
      %284 = vmatprep.subr.bf16.mxu0 0
      %285 = vmatpush2.bf16.msra.mxu0 0
      %286 = vmatprep.subr.bf16.mxu0 0
      %287 = vmatpush2.bf16.msra.mxu0 0
      %288 = vmatprep.subr.bf16.mxu0 0
      %289 = vmatpush2.bf16.msra.mxu0 0
      %290 = vmatprep.subr.bf16.mxu0 0
      %291 = vmatpush2.bf16.msra.mxu0 0
      %292 = vmatprep.subr.bf16.mxu0 0
      %293 = vmatpush2.bf16.msra.mxu0 0
      %294 = vmatprep.subr.bf16.mxu0 0
      %295 = vmatpush2.bf16.msra.mxu0 0
      %296 = vmatprep.subr.bf16.mxu0 0
      %297 = vmatpush2.bf16.msra.mxu0 0
      %298 = vmatprep.mubr.bf16.mxu0 0
      %299 = vmatmul.mubr.bf16.gmra.mxu0 %v260
      %v300 = vpop.f32.mrf.mxu0
      %v301 = vadd.f32 0.0, %v300
      %v302 = vpop.f32.mrf.mxu0
      %v303 = vpop.f32.mrf.mxu0
      %v304 = vpop.f32.mrf.mxu0
      %305 = vdwg.mxu0
      %v307 = vsel %vm258, %v253, 0
      %v310 = vsel %vm262, %v252, 0
      %312 = vmatprep.subr.bf16.mxu0 0
      %313 = vmatpush1.bf16.msra.mxu0 0
      %314 = vmatprep.subr.bf16.mxu0 0
      %315 = vmatpush1.bf16.msra.mxu0 0
      %316 = vmatprep.subr.bf16.mxu0 0
      %317 = vmatpush1.bf16.msra.mxu0 0
      %318 = vmatprep.subr.bf16.mxu0 0
      %319 = vmatpush1.bf16.msra.mxu0 0
      %320 = vmatprep.subr.bf16.mxu0 0
      %321 = vmatpush1.bf16.msra.mxu0 0
      %322 = vmatprep.subr.bf16.mxu0 0
      %323 = vmatpush1.bf16.msra.mxu0 0
      %324 = vmatprep.subr.bf16.mxu0 0
      %325 = vmatpush1.bf16.msra.mxu0 0
      %326 = vmatprep.subr.bf16.mxu0 0
      %327 = vmatpush1.bf16.msra.mxu0 %v310
      %328 = vmatprep.subr.bf16.mxu0 0
      %329 = vmatpush2.bf16.msra.mxu0 0
      %330 = vmatprep.subr.bf16.mxu0 0
      %331 = vmatpush2.bf16.msra.mxu0 0
      %332 = vmatprep.subr.bf16.mxu0 0
      %333 = vmatpush2.bf16.msra.mxu0 0
      %334 = vmatprep.subr.bf16.mxu0 0
      %335 = vmatpush2.bf16.msra.mxu0 0
      %336 = vmatprep.subr.bf16.mxu0 0
      %337 = vmatpush2.bf16.msra.mxu0 0
      %338 = vmatprep.subr.bf16.mxu0 0
      %339 = vmatpush2.bf16.msra.mxu0 0
      %340 = vmatprep.subr.bf16.mxu0 0
      %341 = vmatpush2.bf16.msra.mxu0 0
      %342 = vmatprep.subr.bf16.mxu0 0
      %343 = vmatpush2.bf16.msra.mxu0 0
      %344 = vmatprep.mubr.bf16.mxu0 0
      %345 = vmatmul.mubr.bf16.gmra.mxu0 %v307
      %v346 = vpop.f32.mrf.mxu0
      %v347 = vadd.f32 %v301, %v346
      %v348 = vpop.f32.mrf.mxu0
      %v349 = vpop.f32.mrf.mxu0
      %v350 = vpop.f32.mrf.mxu0
      %351 = vdwg.mxu0
      %v352 = vld [vmem:[%s245] sm:$0xff]
      %s353 = scalar_lea.vmem %s1, 8
      %v354 = vld [vmem:[%s353] sm:$0xf]
      %v356 = vunpack.c.l.b16 %v352
      %v357 = vunpack.c.h.b16 %v352
      %v358 = vpack.c.b16 %v356, %v356
      %v359 = vpack.c.b16 %v357, %v357
      %360 = vrot.lane.b32.xlu0 %v358, 127
      %v361 = vpop.permute.xlu0 %360
      %362 = vrot.lane.b32.xlu0 %v359, 127
      %v363 = vpop.permute.xlu0 %362
      %vm364 = vcmask 1039360
      %v365 = vsel %vm364, %v361, %v363
      %v367 = vsel %vm258, %v354, 0
      %v370 = vsel %vm262, %v365, 0
      %372 = vmatprep.subr.bf16.mxu0 0
      %373 = vmatpush1.bf16.msra.mxu0 0
      %374 = vmatprep.subr.bf16.mxu0 0
      %375 = vmatpush1.bf16.msra.mxu0 0
      %376 = vmatprep.subr.bf16.mxu0 0
      %377 = vmatpush1.bf16.msra.mxu0 0
      %378 = vmatprep.subr.bf16.mxu0 0
      %379 = vmatpush1.bf16.msra.mxu0 0
      %380 = vmatprep.subr.bf16.mxu0 0
      %381 = vmatpush1.bf16.msra.mxu0 0
      %382 = vmatprep.subr.bf16.mxu0 0
      %383 = vmatpush1.bf16.msra.mxu0 0
      %384 = vmatprep.subr.bf16.mxu0 0
      %385 = vmatpush1.bf16.msra.mxu0 0
      %386 = vmatprep.subr.bf16.mxu0 0
      %387 = vmatpush1.bf16.msra.mxu0 %v370
      %388 = vmatprep.subr.bf16.mxu0 0
      %389 = vmatpush2.bf16.msra.mxu0 0
      %390 = vmatprep.subr.bf16.mxu0 0
      %391 = vmatpush2.bf16.msra.mxu0 0
      %392 = vmatprep.subr.bf16.mxu0 0
      %393 = vmatpush2.bf16.msra.mxu0 0
      %394 = vmatprep.subr.bf16.mxu0 0
      %395 = vmatpush2.bf16.msra.mxu0 0
      %396 = vmatprep.subr.bf16.mxu0 0
      %397 = vmatpush2.bf16.msra.mxu0 0
      %398 = vmatprep.subr.bf16.mxu0 0
      %399 = vmatpush2.bf16.msra.mxu0 0
      %400 = vmatprep.subr.bf16.mxu0 0
      %401 = vmatpush2.bf16.msra.mxu0 0
      %402 = vmatprep.subr.bf16.mxu0 0
      %403 = vmatpush2.bf16.msra.mxu0 0
      %404 = vmatprep.mubr.bf16.mxu0 0
      %405 = vmatmul.mubr.bf16.gmra.mxu0 %v367
      %v406 = vpop.f32.mrf.mxu0
      %v407 = vadd.f32 0.0, %v406
      %v408 = vpop.f32.mrf.mxu0
      %v409 = vpop.f32.mrf.mxu0
      %v410 = vpop.f32.mrf.mxu0
      %411 = vdwg.mxu0
      %v412 = vadd.f32 %v347, %v407
      %s413 = scalar_lea.vmem %s245, 16
      %v414 = vld [vmem:[%s413] sm:$0xf]
      %s415 = scalar_lea.vmem %s1, 12
      %v416 = vld [vmem:[%s415] sm:$0xf]
      %v418 = vsel %vm258, %v416, 0
      %v421 = vsel %vm262, %v414, 0
      %423 = vmatprep.subr.bf16.mxu0 0
      %424 = vmatpush1.bf16.msra.mxu0 0
      %425 = vmatprep.subr.bf16.mxu0 0
      %426 = vmatpush1.bf16.msra.mxu0 0
      %427 = vmatprep.subr.bf16.mxu0 0
      %428 = vmatpush1.bf16.msra.mxu0 0
      %429 = vmatprep.subr.bf16.mxu0 0
      %430 = vmatpush1.bf16.msra.mxu0 0
      %431 = vmatprep.subr.bf16.mxu0 0
      %432 = vmatpush1.bf16.msra.mxu0 0
      %433 = vmatprep.subr.bf16.mxu0 0
      %434 = vmatpush1.bf16.msra.mxu0 0
      %435 = vmatprep.subr.bf16.mxu0 0
      %436 = vmatpush1.bf16.msra.mxu0 0
      %437 = vmatprep.subr.bf16.mxu0 0
      %438 = vmatpush1.bf16.msra.mxu0 %v421
      %439 = vmatprep.subr.bf16.mxu0 0
      %440 = vmatpush2.bf16.msra.mxu0 0
      %441 = vmatprep.subr.bf16.mxu0 0
      %442 = vmatpush2.bf16.msra.mxu0 0
      %443 = vmatprep.subr.bf16.mxu0 0
      %444 = vmatpush2.bf16.msra.mxu0 0
      %445 = vmatprep.subr.bf16.mxu0 0
      %446 = vmatpush2.bf16.msra.mxu0 0
      %447 = vmatprep.subr.bf16.mxu0 0
      %448 = vmatpush2.bf16.msra.mxu0 0
      %449 = vmatprep.subr.bf16.mxu0 0
      %450 = vmatpush2.bf16.msra.mxu0 0
      %451 = vmatprep.subr.bf16.mxu0 0
      %452 = vmatpush2.bf16.msra.mxu0 0
      %453 = vmatprep.subr.bf16.mxu0 0
      %454 = vmatpush2.bf16.msra.mxu0 0
      %455 = vmatprep.mubr.bf16.mxu0 0
      %456 = vmatmul.mubr.bf16.gmra.mxu0 %v418
      %v457 = vpop.f32.mrf.mxu0
      %v458 = vadd.f32 0.0, %v457
      %v459 = vpop.f32.mrf.mxu0
      %v460 = vpop.f32.mrf.mxu0
      %v461 = vpop.f32.mrf.mxu0
      %462 = vdwg.mxu0
      %v463 = vadd.f32 %v412, %v458
      %s464 = scalar_lea.vmem %s245, 24
      %v465 = vld [vmem:[%s464] sm:$0xf]
      %s466 = scalar_lea.vmem %s1, 16
      %v467 = vld [vmem:[%s466] sm:$0xf]
      %v469 = vsel %vm258, %v467, 0
      %v472 = vsel %vm262, %v465, 0
      %474 = vmatprep.subr.bf16.mxu0 0
      %475 = vmatpush1.bf16.msra.mxu0 0
      %476 = vmatprep.subr.bf16.mxu0 0
      %477 = vmatpush1.bf16.msra.mxu0 0
      %478 = vmatprep.subr.bf16.mxu0 0
      %479 = vmatpush1.bf16.msra.mxu0 0
      %480 = vmatprep.subr.bf16.mxu0 0
      %481 = vmatpush1.bf16.msra.mxu0 0
      %482 = vmatprep.subr.bf16.mxu0 0
      %483 = vmatpush1.bf16.msra.mxu0 0
      %484 = vmatprep.subr.bf16.mxu0 0
      %485 = vmatpush1.bf16.msra.mxu0 0
      %486 = vmatprep.subr.bf16.mxu0 0
      %487 = vmatpush1.bf16.msra.mxu0 0
      %488 = vmatprep.subr.bf16.mxu0 0
      %489 = vmatpush1.bf16.msra.mxu0 %v472
      %490 = vmatprep.subr.bf16.mxu0 0
      %491 = vmatpush2.bf16.msra.mxu0 0
      %492 = vmatprep.subr.bf16.mxu0 0
      %493 = vmatpush2.bf16.msra.mxu0 0
      %494 = vmatprep.subr.bf16.mxu0 0
      %495 = vmatpush2.bf16.msra.mxu0 0
      %496 = vmatprep.subr.bf16.mxu0 0
      %497 = vmatpush2.bf16.msra.mxu0 0
      %498 = vmatprep.subr.bf16.mxu0 0
      %499 = vmatpush2.bf16.msra.mxu0 0
      %500 = vmatprep.subr.bf16.mxu0 0
      %501 = vmatpush2.bf16.msra.mxu0 0
      %502 = vmatprep.subr.bf16.mxu0 0
      %503 = vmatpush2.bf16.msra.mxu0 0
      %504 = vmatprep.subr.bf16.mxu0 0
      %505 = vmatpush2.bf16.msra.mxu0 0
      %506 = vmatprep.mubr.bf16.mxu0 0
      %507 = vmatmul.mubr.bf16.gmra.mxu0 %v469
      %v508 = vpop.f32.mrf.mxu0
      %v509 = vadd.f32 0.0, %v508
      %v510 = vpop.f32.mrf.mxu0
      %v511 = vpop.f32.mrf.mxu0
      %v512 = vpop.f32.mrf.mxu0
      %513 = vdwg.mxu0
      %v514 = vadd.f32 %v463, %v509
      %v515 = vld [vmem:[%s413] sm:$0xff]
      %s516 = scalar_lea.vmem %s1, 20
      %v517 = vld [vmem:[%s516] sm:$0xf]
      %v519 = vunpack.c.l.b16 %v515
      %v520 = vunpack.c.h.b16 %v515
      %v521 = vpack.c.b16 %v519, %v519
      %v522 = vpack.c.b16 %v520, %v520
      %523 = vrot.lane.b32.xlu0 %v521, 127
      %v524 = vpop.permute.xlu0 %523
      %525 = vrot.lane.b32.xlu0 %v522, 127
      %v526 = vpop.permute.xlu0 %525
      %v527 = vsel %vm364, %v524, %v526
      %v529 = vsel %vm258, %v517, 0
      %v532 = vsel %vm262, %v527, 0
      %534 = vmatprep.subr.bf16.mxu0 0
      %535 = vmatpush1.bf16.msra.mxu0 0
      %536 = vmatprep.subr.bf16.mxu0 0
      %537 = vmatpush1.bf16.msra.mxu0 0
      %538 = vmatprep.subr.bf16.mxu0 0
      %539 = vmatpush1.bf16.msra.mxu0 0
      %540 = vmatprep.subr.bf16.mxu0 0
      %541 = vmatpush1.bf16.msra.mxu0 0
      %542 = vmatprep.subr.bf16.mxu0 0
      %543 = vmatpush1.bf16.msra.mxu0 0
      %544 = vmatprep.subr.bf16.mxu0 0
      %545 = vmatpush1.bf16.msra.mxu0 0
      %546 = vmatprep.subr.bf16.mxu0 0
      %547 = vmatpush1.bf16.msra.mxu0 0
      %548 = vmatprep.subr.bf16.mxu0 0
      %549 = vmatpush1.bf16.msra.mxu0 %v532
      %550 = vmatprep.subr.bf16.mxu0 0
      %551 = vmatpush2.bf16.msra.mxu0 0
      %552 = vmatprep.subr.bf16.mxu0 0
      %553 = vmatpush2.bf16.msra.mxu0 0
      %554 = vmatprep.subr.bf16.mxu0 0
      %555 = vmatpush2.bf16.msra.mxu0 0
      %556 = vmatprep.subr.bf16.mxu0 0
      %557 = vmatpush2.bf16.msra.mxu0 0
      %558 = vmatprep.subr.bf16.mxu0 0
      %559 = vmatpush2.bf16.msra.mxu0 0
      %560 = vmatprep.subr.bf16.mxu0 0
      %561 = vmatpush2.bf16.msra.mxu0 0
      %562 = vmatprep.subr.bf16.mxu0 0
      %563 = vmatpush2.bf16.msra.mxu0 0
      %564 = vmatprep.subr.bf16.mxu0 0
      %565 = vmatpush2.bf16.msra.mxu0 0
      %566 = vmatprep.mubr.bf16.mxu0 0
      %567 = vmatmul.mubr.bf16.gmra.mxu0 %v529
      %v568 = vpop.f32.mrf.mxu0
      %v569 = vadd.f32 0.0, %v568
      %v570 = vpop.f32.mrf.mxu0
      %v571 = vpop.f32.mrf.mxu0
      %v572 = vpop.f32.mrf.mxu0
      %573 = vdwg.mxu0
      %v574 = vadd.f32 %v514, %v569
      %s575 = scalar_lea.vmem %s1, 24
      %v576 = vld [vmem:[%s575] sm:$0xf]
      %577 = vrot.lane.b32.xlu0 %v358, 119
      %v578 = vpop.permute.xlu0 %577
      %579 = vrot.lane.b32.xlu0 %v359, 119
      %v580 = vpop.permute.xlu0 %579
      %vm581 = vcmask 973824
      %v582 = vsel %vm581, %v578, %v580
      %v584 = vsel %vm258, %v576, 0
      %v587 = vsel %vm262, %v582, 0
      %589 = vmatprep.subr.bf16.mxu0 0
      %590 = vmatpush1.bf16.msra.mxu0 0
      %591 = vmatprep.subr.bf16.mxu0 0
      %592 = vmatpush1.bf16.msra.mxu0 0
      %593 = vmatprep.subr.bf16.mxu0 0
      %594 = vmatpush1.bf16.msra.mxu0 0
      %595 = vmatprep.subr.bf16.mxu0 0
      %596 = vmatpush1.bf16.msra.mxu0 0
      %597 = vmatprep.subr.bf16.mxu0 0
      %598 = vmatpush1.bf16.msra.mxu0 0
      %599 = vmatprep.subr.bf16.mxu0 0
      %600 = vmatpush1.bf16.msra.mxu0 0
      %601 = vmatprep.subr.bf16.mxu0 0
      %602 = vmatpush1.bf16.msra.mxu0 0
      %603 = vmatprep.subr.bf16.mxu0 0
      %604 = vmatpush1.bf16.msra.mxu0 %v587
      %605 = vmatprep.subr.bf16.mxu0 0
      %606 = vmatpush2.bf16.msra.mxu0 0
      %607 = vmatprep.subr.bf16.mxu0 0
      %608 = vmatpush2.bf16.msra.mxu0 0
      %609 = vmatprep.subr.bf16.mxu0 0
      %610 = vmatpush2.bf16.msra.mxu0 0
      %611 = vmatprep.subr.bf16.mxu0 0
      %612 = vmatpush2.bf16.msra.mxu0 0
      %613 = vmatprep.subr.bf16.mxu0 0
      %614 = vmatpush2.bf16.msra.mxu0 0
      %615 = vmatprep.subr.bf16.mxu0 0
      %616 = vmatpush2.bf16.msra.mxu0 0
      %617 = vmatprep.subr.bf16.mxu0 0
      %618 = vmatpush2.bf16.msra.mxu0 0
      %619 = vmatprep.subr.bf16.mxu0 0
      %620 = vmatpush2.bf16.msra.mxu0 0
      %621 = vmatprep.mubr.bf16.mxu0 0
      %622 = vmatmul.mubr.bf16.gmra.mxu0 %v584
      %v623 = vpop.f32.mrf.mxu0
      %v624 = vadd.f32 0.0, %v623
      %v625 = vpop.f32.mrf.mxu0
      %v626 = vpop.f32.mrf.mxu0
      %v627 = vpop.f32.mrf.mxu0
      %628 = vdwg.mxu0
      %v629 = vadd.f32 %v574, %v624
      %v630 = vld [vmem:[%s254] sm:$0xff]
      %s631 = scalar_lea.vmem %s1, 28
      %v632 = vld [vmem:[%s631] sm:$0xf]
      %v634 = vunpack.c.l.b16 %v630
      %v635 = vunpack.c.h.b16 %v630
      %v636 = vpack.c.b16 %v634, %v634
      %v637 = vpack.c.b16 %v635, %v635
      %638 = vrot.lane.b32.xlu0 %v636, 119
      %v639 = vpop.permute.xlu0 %638
      %640 = vrot.lane.b32.xlu0 %v637, 119
      %v641 = vpop.permute.xlu0 %640
      %v642 = vsel %vm581, %v639, %v641
      %v644 = vsel %vm258, %v632, 0
      %v647 = vsel %vm262, %v642, 0
      %649 = vmatprep.subr.bf16.mxu0 0
      %650 = vmatpush1.bf16.msra.mxu0 0
      %651 = vmatprep.subr.bf16.mxu0 0
      %652 = vmatpush1.bf16.msra.mxu0 0
      %653 = vmatprep.subr.bf16.mxu0 0
      %654 = vmatpush1.bf16.msra.mxu0 0
      %655 = vmatprep.subr.bf16.mxu0 0
      %656 = vmatpush1.bf16.msra.mxu0 0
      %657 = vmatprep.subr.bf16.mxu0 0
      %658 = vmatpush1.bf16.msra.mxu0 0
      %659 = vmatprep.subr.bf16.mxu0 0
      %660 = vmatpush1.bf16.msra.mxu0 0
      %661 = vmatprep.subr.bf16.mxu0 0
      %662 = vmatpush1.bf16.msra.mxu0 0
      %663 = vmatprep.subr.bf16.mxu0 0
      %664 = vmatpush1.bf16.msra.mxu0 %v647
      %665 = vmatprep.subr.bf16.mxu0 0
      %666 = vmatpush2.bf16.msra.mxu0 0
      %667 = vmatprep.subr.bf16.mxu0 0
      %668 = vmatpush2.bf16.msra.mxu0 0
      %669 = vmatprep.subr.bf16.mxu0 0
      %670 = vmatpush2.bf16.msra.mxu0 0
      %671 = vmatprep.subr.bf16.mxu0 0
      %672 = vmatpush2.bf16.msra.mxu0 0
      %673 = vmatprep.subr.bf16.mxu0 0
      %674 = vmatpush2.bf16.msra.mxu0 0
      %675 = vmatprep.subr.bf16.mxu0 0
      %676 = vmatpush2.bf16.msra.mxu0 0
      %677 = vmatprep.subr.bf16.mxu0 0
      %678 = vmatpush2.bf16.msra.mxu0 0
      %679 = vmatprep.subr.bf16.mxu0 0
      %680 = vmatpush2.bf16.msra.mxu0 0
      %681 = vmatprep.mubr.bf16.mxu0 0
      %682 = vmatmul.mubr.bf16.gmra.mxu0 %v644
      %v683 = vpop.f32.mrf.mxu0
      %v684 = vadd.f32 0.0, %v683
      %v685 = vpop.f32.mrf.mxu0
      %v686 = vpop.f32.mrf.mxu0
      %v687 = vpop.f32.mrf.mxu0
      %688 = vdwg.mxu0
      %v689 = vadd.f32 %v629, %v684
      %s690 = scalar_lea.vmem %s1, 32
      %v691 = vld [vmem:[%s690] sm:$0xf]
      %692 = vrot.lane.b32.xlu0 %v358, 118
      %v693 = vpop.permute.xlu0 %692
      %694 = vrot.lane.b32.xlu0 %v359, 118
      %v695 = vpop.permute.xlu0 %694
      %vm696 = vcmask 965632
      %v697 = vsel %vm696, %v693, %v695
      %v699 = vsel %vm258, %v691, 0
      %v702 = vsel %vm262, %v697, 0
      %704 = vmatprep.subr.bf16.mxu0 0
      %705 = vmatpush1.bf16.msra.mxu0 0
      %706 = vmatprep.subr.bf16.mxu0 0
      %707 = vmatpush1.bf16.msra.mxu0 0
      %708 = vmatprep.subr.bf16.mxu0 0
      %709 = vmatpush1.bf16.msra.mxu0 0
      %710 = vmatprep.subr.bf16.mxu0 0
      %711 = vmatpush1.bf16.msra.mxu0 0
      %712 = vmatprep.subr.bf16.mxu0 0
      %713 = vmatpush1.bf16.msra.mxu0 0
      %714 = vmatprep.subr.bf16.mxu0 0
      %715 = vmatpush1.bf16.msra.mxu0 0
      %716 = vmatprep.subr.bf16.mxu0 0
      %717 = vmatpush1.bf16.msra.mxu0 0
      %718 = vmatprep.subr.bf16.mxu0 0
      %719 = vmatpush1.bf16.msra.mxu0 %v702
      %720 = vmatprep.subr.bf16.mxu0 0
      %721 = vmatpush2.bf16.msra.mxu0 0
      %722 = vmatprep.subr.bf16.mxu0 0
      %723 = vmatpush2.bf16.msra.mxu0 0
      %724 = vmatprep.subr.bf16.mxu0 0
      %725 = vmatpush2.bf16.msra.mxu0 0
      %726 = vmatprep.subr.bf16.mxu0 0
      %727 = vmatpush2.bf16.msra.mxu0 0
      %728 = vmatprep.subr.bf16.mxu0 0
      %729 = vmatpush2.bf16.msra.mxu0 0
      %730 = vmatprep.subr.bf16.mxu0 0
      %731 = vmatpush2.bf16.msra.mxu0 0
      %732 = vmatprep.subr.bf16.mxu0 0
      %733 = vmatpush2.bf16.msra.mxu0 0
      %734 = vmatprep.subr.bf16.mxu0 0
      %735 = vmatpush2.bf16.msra.mxu0 0
      %736 = vmatprep.mubr.bf16.mxu0 0
      %737 = vmatmul.mubr.bf16.gmra.mxu0 %v699
      %v738 = vpop.f32.mrf.mxu0
      %v739 = vadd.f32 0.0, %v738
      %v740 = vpop.f32.mrf.mxu0
      %v741 = vpop.f32.mrf.mxu0
      %v742 = vpop.f32.mrf.mxu0
      %743 = vdwg.mxu0
      %v744 = vadd.f32 %v689, %v739
      %746 = vset.pattern.permute.xlu0 0
      %747 = vperm.xlu0 %746, %v251
      %v748 = vpop.permute.xlu0 %747
      %v750 = vadd.f32 %v744, %v748
      %v751 = vmax.f32 %v750, 0.0
      %v752 = vadd.f32 %v751, 0.0
      %753 = vmatprep.subr.bf16.mxu0 0
      %754 = vmatpush1.bf16.msra.mxu0 0
      %755 = vmatprep.subr.bf16.mxu0 0
      %756 = vmatpush1.bf16.msra.mxu0 0
      %757 = vmatprep.subr.bf16.mxu0 0
      %758 = vmatpush1.bf16.msra.mxu0 0
      %759 = vmatprep.subr.bf16.mxu0 0
      %760 = vmatpush1.bf16.msra.mxu0 0
      %761 = vmatprep.subr.bf16.mxu0 0
      %762 = vmatpush1.bf16.msra.mxu0 0
      %763 = vmatprep.subr.bf16.mxu0 0
      %764 = vmatpush1.bf16.msra.mxu0 0
      %765 = vmatprep.subr.bf16.mxu0 0
      %766 = vmatpush1.bf16.msra.mxu0 0
      %767 = vmatprep.subr.bf16.mxu0 0
      %768 = vmatpush1.bf16.msra.mxu0 %v370
      %769 = vmatprep.subr.bf16.mxu0 0
      %770 = vmatpush2.bf16.msra.mxu0 0
      %771 = vmatprep.subr.bf16.mxu0 0
      %772 = vmatpush2.bf16.msra.mxu0 0
      %773 = vmatprep.subr.bf16.mxu0 0
      %774 = vmatpush2.bf16.msra.mxu0 0
      %775 = vmatprep.subr.bf16.mxu0 0
      %776 = vmatpush2.bf16.msra.mxu0 0
      %777 = vmatprep.subr.bf16.mxu0 0
      %778 = vmatpush2.bf16.msra.mxu0 0
      %779 = vmatprep.subr.bf16.mxu0 0
      %780 = vmatpush2.bf16.msra.mxu0 0
      %781 = vmatprep.subr.bf16.mxu0 0
      %782 = vmatpush2.bf16.msra.mxu0 0
      %783 = vmatprep.subr.bf16.mxu0 0
      %784 = vmatpush2.bf16.msra.mxu0 0
      %785 = vmatprep.mubr.bf16.mxu0 0
      %786 = vmatmul.mubr.bf16.gmra.mxu0 %v260
      %v787 = vpop.f32.mrf.mxu0
      %v788 = vadd.f32 0.0, %v787
      %v789 = vpop.f32.mrf.mxu0
      %v790 = vpop.f32.mrf.mxu0
      %v791 = vpop.f32.mrf.mxu0
      %792 = vdwg.mxu0
      %793 = vmatprep.subr.bf16.mxu0 0
      %794 = vmatpush1.bf16.msra.mxu0 0
      %795 = vmatprep.subr.bf16.mxu0 0
      %796 = vmatpush1.bf16.msra.mxu0 0
      %797 = vmatprep.subr.bf16.mxu0 0
      %798 = vmatpush1.bf16.msra.mxu0 0
      %799 = vmatprep.subr.bf16.mxu0 0
      %800 = vmatpush1.bf16.msra.mxu0 0
      %801 = vmatprep.subr.bf16.mxu0 0
      %802 = vmatpush1.bf16.msra.mxu0 0
      %803 = vmatprep.subr.bf16.mxu0 0
      %804 = vmatpush1.bf16.msra.mxu0 0
      %805 = vmatprep.subr.bf16.mxu0 0
      %806 = vmatpush1.bf16.msra.mxu0 0
      %807 = vmatprep.subr.bf16.mxu0 0
      %808 = vmatpush1.bf16.msra.mxu0 %v264
      %809 = vmatprep.subr.bf16.mxu0 0
      %810 = vmatpush2.bf16.msra.mxu0 0
      %811 = vmatprep.subr.bf16.mxu0 0
      %812 = vmatpush2.bf16.msra.mxu0 0
      %813 = vmatprep.subr.bf16.mxu0 0
      %814 = vmatpush2.bf16.msra.mxu0 0
      %815 = vmatprep.subr.bf16.mxu0 0
      %816 = vmatpush2.bf16.msra.mxu0 0
      %817 = vmatprep.subr.bf16.mxu0 0
      %818 = vmatpush2.bf16.msra.mxu0 0
      %819 = vmatprep.subr.bf16.mxu0 0
      %820 = vmatpush2.bf16.msra.mxu0 0
      %821 = vmatprep.subr.bf16.mxu0 0
      %822 = vmatpush2.bf16.msra.mxu0 0
      %823 = vmatprep.subr.bf16.mxu0 0
      %824 = vmatpush2.bf16.msra.mxu0 0
      %825 = vmatprep.mubr.bf16.mxu0 0
      %826 = vmatmul.mubr.bf16.gmra.mxu0 %v307
      %v827 = vpop.f32.mrf.mxu0
      %v828 = vadd.f32 %v788, %v827
      %v829 = vpop.f32.mrf.mxu0
      %v830 = vpop.f32.mrf.mxu0
      %v831 = vpop.f32.mrf.mxu0
      %832 = vdwg.mxu0
      %833 = vrot.lane.b32.xlu0 %v636, 127
      %v834 = vpop.permute.xlu0 %833
      %835 = vrot.lane.b32.xlu0 %v637, 127
      %v836 = vpop.permute.xlu0 %835
      %v837 = vsel %vm364, %v834, %v836
      %v839 = vsel %vm262, %v837, 0
      %841 = vmatprep.subr.bf16.mxu0 0
      %842 = vmatpush1.bf16.msra.mxu0 0
      %843 = vmatprep.subr.bf16.mxu0 0
      %844 = vmatpush1.bf16.msra.mxu0 0
      %845 = vmatprep.subr.bf16.mxu0 0
      %846 = vmatpush1.bf16.msra.mxu0 0
      %847 = vmatprep.subr.bf16.mxu0 0
      %848 = vmatpush1.bf16.msra.mxu0 0
      %849 = vmatprep.subr.bf16.mxu0 0
      %850 = vmatpush1.bf16.msra.mxu0 0
      %851 = vmatprep.subr.bf16.mxu0 0
      %852 = vmatpush1.bf16.msra.mxu0 0
      %853 = vmatprep.subr.bf16.mxu0 0
      %854 = vmatpush1.bf16.msra.mxu0 0
      %855 = vmatprep.subr.bf16.mxu0 0
      %856 = vmatpush1.bf16.msra.mxu0 %v839
      %857 = vmatprep.subr.bf16.mxu0 0
      %858 = vmatpush2.bf16.msra.mxu0 0
      %859 = vmatprep.subr.bf16.mxu0 0
      %860 = vmatpush2.bf16.msra.mxu0 0
      %861 = vmatprep.subr.bf16.mxu0 0
      %862 = vmatpush2.bf16.msra.mxu0 0
      %863 = vmatprep.subr.bf16.mxu0 0
      %864 = vmatpush2.bf16.msra.mxu0 0
      %865 = vmatprep.subr.bf16.mxu0 0
      %866 = vmatpush2.bf16.msra.mxu0 0
      %867 = vmatprep.subr.bf16.mxu0 0
      %868 = vmatpush2.bf16.msra.mxu0 0
      %869 = vmatprep.subr.bf16.mxu0 0
      %870 = vmatpush2.bf16.msra.mxu0 0
      %871 = vmatprep.subr.bf16.mxu0 0
      %872 = vmatpush2.bf16.msra.mxu0 0
      %873 = vmatprep.mubr.bf16.mxu0 0
      %874 = vmatmul.mubr.bf16.gmra.mxu0 %v367
      %v875 = vpop.f32.mrf.mxu0
      %v876 = vadd.f32 0.0, %v875
      %v877 = vpop.f32.mrf.mxu0
      %v878 = vpop.f32.mrf.mxu0
      %v879 = vpop.f32.mrf.mxu0
      %880 = vdwg.mxu0
      %v881 = vadd.f32 %v828, %v876
      %882 = vmatprep.subr.bf16.mxu0 0
      %883 = vmatpush1.bf16.msra.mxu0 0
      %884 = vmatprep.subr.bf16.mxu0 0
      %885 = vmatpush1.bf16.msra.mxu0 0
      %886 = vmatprep.subr.bf16.mxu0 0
      %887 = vmatpush1.bf16.msra.mxu0 0
      %888 = vmatprep.subr.bf16.mxu0 0
      %889 = vmatpush1.bf16.msra.mxu0 0
      %890 = vmatprep.subr.bf16.mxu0 0
      %891 = vmatpush1.bf16.msra.mxu0 0
      %892 = vmatprep.subr.bf16.mxu0 0
      %893 = vmatpush1.bf16.msra.mxu0 0
      %894 = vmatprep.subr.bf16.mxu0 0
      %895 = vmatpush1.bf16.msra.mxu0 0
      %896 = vmatprep.subr.bf16.mxu0 0
      %897 = vmatpush1.bf16.msra.mxu0 %v472
      %898 = vmatprep.subr.bf16.mxu0 0
      %899 = vmatpush2.bf16.msra.mxu0 0
      %900 = vmatprep.subr.bf16.mxu0 0
      %901 = vmatpush2.bf16.msra.mxu0 0
      %902 = vmatprep.subr.bf16.mxu0 0
      %903 = vmatpush2.bf16.msra.mxu0 0
      %904 = vmatprep.subr.bf16.mxu0 0
      %905 = vmatpush2.bf16.msra.mxu0 0
      %906 = vmatprep.subr.bf16.mxu0 0
      %907 = vmatpush2.bf16.msra.mxu0 0
      %908 = vmatprep.subr.bf16.mxu0 0
      %909 = vmatpush2.bf16.msra.mxu0 0
      %910 = vmatprep.subr.bf16.mxu0 0
      %911 = vmatpush2.bf16.msra.mxu0 0
      %912 = vmatprep.subr.bf16.mxu0 0
      %913 = vmatpush2.bf16.msra.mxu0 0
      %914 = vmatprep.mubr.bf16.mxu0 0
      %915 = vmatmul.mubr.bf16.gmra.mxu0 %v418
      %v916 = vpop.f32.mrf.mxu0
      %v917 = vadd.f32 0.0, %v916
      %v918 = vpop.f32.mrf.mxu0
      %v919 = vpop.f32.mrf.mxu0
      %v920 = vpop.f32.mrf.mxu0
      %921 = vdwg.mxu0
      %v922 = vadd.f32 %v881, %v917
      %923 = vmatprep.subr.bf16.mxu0 0
      %924 = vmatpush1.bf16.msra.mxu0 0
      %925 = vmatprep.subr.bf16.mxu0 0
      %926 = vmatpush1.bf16.msra.mxu0 0
      %927 = vmatprep.subr.bf16.mxu0 0
      %928 = vmatpush1.bf16.msra.mxu0 0
      %929 = vmatprep.subr.bf16.mxu0 0
      %930 = vmatpush1.bf16.msra.mxu0 0
      %931 = vmatprep.subr.bf16.mxu0 0
      %932 = vmatpush1.bf16.msra.mxu0 0
      %933 = vmatprep.subr.bf16.mxu0 0
      %934 = vmatpush1.bf16.msra.mxu0 0
      %935 = vmatprep.subr.bf16.mxu0 0
      %936 = vmatpush1.bf16.msra.mxu0 0
      %937 = vmatprep.subr.bf16.mxu0 0
      %938 = vmatpush1.bf16.msra.mxu0 %v532
      %939 = vmatprep.subr.bf16.mxu0 0
      %940 = vmatpush2.bf16.msra.mxu0 0
      %941 = vmatprep.subr.bf16.mxu0 0
      %942 = vmatpush2.bf16.msra.mxu0 0
      %943 = vmatprep.subr.bf16.mxu0 0
      %944 = vmatpush2.bf16.msra.mxu0 0
      %945 = vmatprep.subr.bf16.mxu0 0
      %946 = vmatpush2.bf16.msra.mxu0 0
      %947 = vmatprep.subr.bf16.mxu0 0
      %948 = vmatpush2.bf16.msra.mxu0 0
      %949 = vmatprep.subr.bf16.mxu0 0
      %950 = vmatpush2.bf16.msra.mxu0 0
      %951 = vmatprep.subr.bf16.mxu0 0
      %952 = vmatpush2.bf16.msra.mxu0 0
      %953 = vmatprep.subr.bf16.mxu0 0
      %954 = vmatpush2.bf16.msra.mxu0 0
      %955 = vmatprep.mubr.bf16.mxu0 0
      %956 = vmatmul.mubr.bf16.gmra.mxu0 %v469
      %v957 = vpop.f32.mrf.mxu0
      %v958 = vadd.f32 0.0, %v957
      %v959 = vpop.f32.mrf.mxu0
      %v960 = vpop.f32.mrf.mxu0
      %v961 = vpop.f32.mrf.mxu0
      %962 = vdwg.mxu0
      %v963 = vadd.f32 %v922, %v958
      %v964 = vld [vmem:[%s464] sm:$0xff]
      %v966 = vunpack.c.l.b16 %v964
      %v967 = vunpack.c.h.b16 %v964
      %v968 = vpack.c.b16 %v966, %v966
      %v969 = vpack.c.b16 %v967, %v967
      %970 = vrot.lane.b32.xlu0 %v968, 127
      %v971 = vpop.permute.xlu0 %970
      %972 = vrot.lane.b32.xlu0 %v969, 127
      %v973 = vpop.permute.xlu0 %972
      %v974 = vsel %vm364, %v971, %v973
      %v976 = vsel %vm262, %v974, 0
      %978 = vmatprep.subr.bf16.mxu0 0
      %979 = vmatpush1.bf16.msra.mxu0 0
      %980 = vmatprep.subr.bf16.mxu0 0
      %981 = vmatpush1.bf16.msra.mxu0 0
      %982 = vmatprep.subr.bf16.mxu0 0
      %983 = vmatpush1.bf16.msra.mxu0 0
      %984 = vmatprep.subr.bf16.mxu0 0
      %985 = vmatpush1.bf16.msra.mxu0 0
      %986 = vmatprep.subr.bf16.mxu0 0
      %987 = vmatpush1.bf16.msra.mxu0 0
      %988 = vmatprep.subr.bf16.mxu0 0
      %989 = vmatpush1.bf16.msra.mxu0 0
      %990 = vmatprep.subr.bf16.mxu0 0
      %991 = vmatpush1.bf16.msra.mxu0 0
      %992 = vmatprep.subr.bf16.mxu0 0
      %993 = vmatpush1.bf16.msra.mxu0 %v976
      %994 = vmatprep.subr.bf16.mxu0 0
      %995 = vmatpush2.bf16.msra.mxu0 0
      %996 = vmatprep.subr.bf16.mxu0 0
      %997 = vmatpush2.bf16.msra.mxu0 0
      %998 = vmatprep.subr.bf16.mxu0 0
      %999 = vmatpush2.bf16.msra.mxu0 0
      %1000 = vmatprep.subr.bf16.mxu0 0
      %1001 = vmatpush2.bf16.msra.mxu0 0
      %1002 = vmatprep.subr.bf16.mxu0 0
      %1003 = vmatpush2.bf16.msra.mxu0 0
      %1004 = vmatprep.subr.bf16.mxu0 0
      %1005 = vmatpush2.bf16.msra.mxu0 0
      %1006 = vmatprep.subr.bf16.mxu0 0
      %1007 = vmatpush2.bf16.msra.mxu0 0
      %1008 = vmatprep.subr.bf16.mxu0 0
      %1009 = vmatpush2.bf16.msra.mxu0 0
      %1010 = vmatprep.mubr.bf16.mxu0 0
      %1011 = vmatmul.mubr.bf16.gmra.mxu0 %v529
      %v1012 = vpop.f32.mrf.mxu0
      %v1013 = vadd.f32 0.0, %v1012
      %v1014 = vpop.f32.mrf.mxu0
      %v1015 = vpop.f32.mrf.mxu0
      %v1016 = vpop.f32.mrf.mxu0
      %1017 = vdwg.mxu0
      %v1018 = vadd.f32 %v963, %v1013
      %1019 = vmatprep.subr.bf16.mxu0 0
      %1020 = vmatpush1.bf16.msra.mxu0 0
      %1021 = vmatprep.subr.bf16.mxu0 0
      %1022 = vmatpush1.bf16.msra.mxu0 0
      %1023 = vmatprep.subr.bf16.mxu0 0
      %1024 = vmatpush1.bf16.msra.mxu0 0
      %1025 = vmatprep.subr.bf16.mxu0 0
      %1026 = vmatpush1.bf16.msra.mxu0 0
      %1027 = vmatprep.subr.bf16.mxu0 0
      %1028 = vmatpush1.bf16.msra.mxu0 0
      %1029 = vmatprep.subr.bf16.mxu0 0
      %1030 = vmatpush1.bf16.msra.mxu0 0
      %1031 = vmatprep.subr.bf16.mxu0 0
      %1032 = vmatpush1.bf16.msra.mxu0 0
      %1033 = vmatprep.subr.bf16.mxu0 0
      %1034 = vmatpush1.bf16.msra.mxu0 %v647
      %1035 = vmatprep.subr.bf16.mxu0 0
      %1036 = vmatpush2.bf16.msra.mxu0 0
      %1037 = vmatprep.subr.bf16.mxu0 0
      %1038 = vmatpush2.bf16.msra.mxu0 0
      %1039 = vmatprep.subr.bf16.mxu0 0
      %1040 = vmatpush2.bf16.msra.mxu0 0
      %1041 = vmatprep.subr.bf16.mxu0 0
      %1042 = vmatpush2.bf16.msra.mxu0 0
      %1043 = vmatprep.subr.bf16.mxu0 0
      %1044 = vmatpush2.bf16.msra.mxu0 0
      %1045 = vmatprep.subr.bf16.mxu0 0
      %1046 = vmatpush2.bf16.msra.mxu0 0
      %1047 = vmatprep.subr.bf16.mxu0 0
      %1048 = vmatpush2.bf16.msra.mxu0 0
      %1049 = vmatprep.subr.bf16.mxu0 0
      %1050 = vmatpush2.bf16.msra.mxu0 0
      %1051 = vmatprep.mubr.bf16.mxu0 0
      %1052 = vmatmul.mubr.bf16.gmra.mxu0 %v584
      %v1053 = vpop.f32.mrf.mxu0
      %v1054 = vadd.f32 0.0, %v1053
      %v1055 = vpop.f32.mrf.mxu0
      %v1056 = vpop.f32.mrf.mxu0
      %v1057 = vpop.f32.mrf.mxu0
      %1058 = vdwg.mxu0
      %v1059 = vadd.f32 %v1018, %v1054
      %1060 = vmatprep.subr.bf16.mxu0 0
      %1061 = vmatpush1.bf16.msra.mxu0 0
      %1062 = vmatprep.subr.bf16.mxu0 0
      %1063 = vmatpush1.bf16.msra.mxu0 0
      %1064 = vmatprep.subr.bf16.mxu0 0
      %1065 = vmatpush1.bf16.msra.mxu0 0
      %1066 = vmatprep.subr.bf16.mxu0 0
      %1067 = vmatpush1.bf16.msra.mxu0 0
      %1068 = vmatprep.subr.bf16.mxu0 0
      %1069 = vmatpush1.bf16.msra.mxu0 0
      %1070 = vmatprep.subr.bf16.mxu0 0
      %1071 = vmatpush1.bf16.msra.mxu0 0
      %1072 = vmatprep.subr.bf16.mxu0 0
      %1073 = vmatpush1.bf16.msra.mxu0 0
      %1074 = vmatprep.subr.bf16.mxu0 0
      %1075 = vmatpush1.bf16.msra.mxu0 %v702
      %1076 = vmatprep.subr.bf16.mxu0 0
      %1077 = vmatpush2.bf16.msra.mxu0 0
      %1078 = vmatprep.subr.bf16.mxu0 0
      %1079 = vmatpush2.bf16.msra.mxu0 0
      %1080 = vmatprep.subr.bf16.mxu0 0
      %1081 = vmatpush2.bf16.msra.mxu0 0
      %1082 = vmatprep.subr.bf16.mxu0 0
      %1083 = vmatpush2.bf16.msra.mxu0 0
      %1084 = vmatprep.subr.bf16.mxu0 0
      %1085 = vmatpush2.bf16.msra.mxu0 0
      %1086 = vmatprep.subr.bf16.mxu0 0
      %1087 = vmatpush2.bf16.msra.mxu0 0
      %1088 = vmatprep.subr.bf16.mxu0 0
      %1089 = vmatpush2.bf16.msra.mxu0 0
      %1090 = vmatprep.subr.bf16.mxu0 0
      %1091 = vmatpush2.bf16.msra.mxu0 0
      %1092 = vmatprep.mubr.bf16.mxu0 0
      %1093 = vmatmul.mubr.bf16.gmra.mxu0 %v644
      %v1094 = vpop.f32.mrf.mxu0
      %v1095 = vadd.f32 0.0, %v1094
      %v1096 = vpop.f32.mrf.mxu0
      %v1097 = vpop.f32.mrf.mxu0
      %v1098 = vpop.f32.mrf.mxu0
      %1099 = vdwg.mxu0
      %v1100 = vadd.f32 %v1059, %v1095
      %1101 = vrot.lane.b32.xlu0 %v636, 118
      %v1102 = vpop.permute.xlu0 %1101
      %1103 = vrot.lane.b32.xlu0 %v637, 118
      %v1104 = vpop.permute.xlu0 %1103
      %v1105 = vsel %vm696, %v1102, %v1104
      %v1107 = vsel %vm262, %v1105, 0
      %1109 = vmatprep.subr.bf16.mxu0 0
      %1110 = vmatpush1.bf16.msra.mxu0 0
      %1111 = vmatprep.subr.bf16.mxu0 0
      %1112 = vmatpush1.bf16.msra.mxu0 0
      %1113 = vmatprep.subr.bf16.mxu0 0
      %1114 = vmatpush1.bf16.msra.mxu0 0
      %1115 = vmatprep.subr.bf16.mxu0 0
      %1116 = vmatpush1.bf16.msra.mxu0 0
      %1117 = vmatprep.subr.bf16.mxu0 0
      %1118 = vmatpush1.bf16.msra.mxu0 0
      %1119 = vmatprep.subr.bf16.mxu0 0
      %1120 = vmatpush1.bf16.msra.mxu0 0
      %1121 = vmatprep.subr.bf16.mxu0 0
      %1122 = vmatpush1.bf16.msra.mxu0 0
      %1123 = vmatprep.subr.bf16.mxu0 0
      %1124 = vmatpush1.bf16.msra.mxu0 %v1107
      %1125 = vmatprep.subr.bf16.mxu0 0
      %1126 = vmatpush2.bf16.msra.mxu0 0
      %1127 = vmatprep.subr.bf16.mxu0 0
      %1128 = vmatpush2.bf16.msra.mxu0 0
      %1129 = vmatprep.subr.bf16.mxu0 0
      %1130 = vmatpush2.bf16.msra.mxu0 0
      %1131 = vmatprep.subr.bf16.mxu0 0
      %1132 = vmatpush2.bf16.msra.mxu0 0
      %1133 = vmatprep.subr.bf16.mxu0 0
      %1134 = vmatpush2.bf16.msra.mxu0 0
      %1135 = vmatprep.subr.bf16.mxu0 0
      %1136 = vmatpush2.bf16.msra.mxu0 0
      %1137 = vmatprep.subr.bf16.mxu0 0
      %1138 = vmatpush2.bf16.msra.mxu0 0
      %1139 = vmatprep.subr.bf16.mxu0 0
      %1140 = vmatpush2.bf16.msra.mxu0 0
      %1141 = vmatprep.mubr.bf16.mxu0 0
      %1142 = vmatmul.mubr.bf16.gmra.mxu0 %v699
      %v1143 = vpop.f32.mrf.mxu0
      %v1144 = vadd.f32 0.0, %v1143
      %v1145 = vpop.f32.mrf.mxu0
      %v1146 = vpop.f32.mrf.mxu0
      %v1147 = vpop.f32.mrf.mxu0
      %1148 = vdwg.mxu0
      %v1149 = vadd.f32 %v1100, %v1144
      %v1150 = vadd.f32 %v1149, %v748
      %v1151 = vmax.f32 %v1150, 0.0
      %v1152 = vadd.f32 %v752, %v1151
      %1153 = vmatprep.subr.bf16.mxu0 0
      %1154 = vmatpush1.bf16.msra.mxu0 0
      %1155 = vmatprep.subr.bf16.mxu0 0
      %1156 = vmatpush1.bf16.msra.mxu0 0
      %1157 = vmatprep.subr.bf16.mxu0 0
      %1158 = vmatpush1.bf16.msra.mxu0 0
      %1159 = vmatprep.subr.bf16.mxu0 0
      %1160 = vmatpush1.bf16.msra.mxu0 0
      %1161 = vmatprep.subr.bf16.mxu0 0
      %1162 = vmatpush1.bf16.msra.mxu0 0
      %1163 = vmatprep.subr.bf16.mxu0 0
      %1164 = vmatpush1.bf16.msra.mxu0 0
      %1165 = vmatprep.subr.bf16.mxu0 0
      %1166 = vmatpush1.bf16.msra.mxu0 0
      %1167 = vmatprep.subr.bf16.mxu0 0
      %1168 = vmatpush1.bf16.msra.mxu0 %v472
      %1169 = vmatprep.subr.bf16.mxu0 0
      %1170 = vmatpush2.bf16.msra.mxu0 0
      %1171 = vmatprep.subr.bf16.mxu0 0
      %1172 = vmatpush2.bf16.msra.mxu0 0
      %1173 = vmatprep.subr.bf16.mxu0 0
      %1174 = vmatpush2.bf16.msra.mxu0 0
      %1175 = vmatprep.subr.bf16.mxu0 0
      %1176 = vmatpush2.bf16.msra.mxu0 0
      %1177 = vmatprep.subr.bf16.mxu0 0
      %1178 = vmatpush2.bf16.msra.mxu0 0
      %1179 = vmatprep.subr.bf16.mxu0 0
      %1180 = vmatpush2.bf16.msra.mxu0 0
      %1181 = vmatprep.subr.bf16.mxu0 0
      %1182 = vmatpush2.bf16.msra.mxu0 0
      %1183 = vmatprep.subr.bf16.mxu0 0
      %1184 = vmatpush2.bf16.msra.mxu0 0
      %1185 = vmatprep.mubr.bf16.mxu0 0
      %1186 = vmatmul.mubr.bf16.gmra.mxu0 %v260
      %v1187 = vpop.f32.mrf.mxu0
      %v1188 = vadd.f32 0.0, %v1187
      %v1189 = vpop.f32.mrf.mxu0
      %v1190 = vpop.f32.mrf.mxu0
      %v1191 = vpop.f32.mrf.mxu0
      %1192 = vdwg.mxu0
      %1193 = vmatprep.subr.bf16.mxu0 0
      %1194 = vmatpush1.bf16.msra.mxu0 0
      %1195 = vmatprep.subr.bf16.mxu0 0
      %1196 = vmatpush1.bf16.msra.mxu0 0
      %1197 = vmatprep.subr.bf16.mxu0 0
      %1198 = vmatpush1.bf16.msra.mxu0 0
      %1199 = vmatprep.subr.bf16.mxu0 0
      %1200 = vmatpush1.bf16.msra.mxu0 0
      %1201 = vmatprep.subr.bf16.mxu0 0
      %1202 = vmatpush1.bf16.msra.mxu0 0
      %1203 = vmatprep.subr.bf16.mxu0 0
      %1204 = vmatpush1.bf16.msra.mxu0 0
      %1205 = vmatprep.subr.bf16.mxu0 0
      %1206 = vmatpush1.bf16.msra.mxu0 0
      %1207 = vmatprep.subr.bf16.mxu0 0
      %1208 = vmatpush1.bf16.msra.mxu0 %v421
      %1209 = vmatprep.subr.bf16.mxu0 0
      %1210 = vmatpush2.bf16.msra.mxu0 0
      %1211 = vmatprep.subr.bf16.mxu0 0
      %1212 = vmatpush2.bf16.msra.mxu0 0
      %1213 = vmatprep.subr.bf16.mxu0 0
      %1214 = vmatpush2.bf16.msra.mxu0 0
      %1215 = vmatprep.subr.bf16.mxu0 0
      %1216 = vmatpush2.bf16.msra.mxu0 0
      %1217 = vmatprep.subr.bf16.mxu0 0
      %1218 = vmatpush2.bf16.msra.mxu0 0
      %1219 = vmatprep.subr.bf16.mxu0 0
      %1220 = vmatpush2.bf16.msra.mxu0 0
      %1221 = vmatprep.subr.bf16.mxu0 0
      %1222 = vmatpush2.bf16.msra.mxu0 0
      %1223 = vmatprep.subr.bf16.mxu0 0
      %1224 = vmatpush2.bf16.msra.mxu0 0
      %1225 = vmatprep.mubr.bf16.mxu0 0
      %1226 = vmatmul.mubr.bf16.gmra.mxu0 %v307
      %v1227 = vpop.f32.mrf.mxu0
      %v1228 = vadd.f32 %v1188, %v1227
      %v1229 = vpop.f32.mrf.mxu0
      %v1230 = vpop.f32.mrf.mxu0
      %v1231 = vpop.f32.mrf.mxu0
      %1232 = vdwg.mxu0
      %1233 = vmatprep.subr.bf16.mxu0 0
      %1234 = vmatpush1.bf16.msra.mxu0 0
      %1235 = vmatprep.subr.bf16.mxu0 0
      %1236 = vmatpush1.bf16.msra.mxu0 0
      %1237 = vmatprep.subr.bf16.mxu0 0
      %1238 = vmatpush1.bf16.msra.mxu0 0
      %1239 = vmatprep.subr.bf16.mxu0 0
      %1240 = vmatpush1.bf16.msra.mxu0 0
      %1241 = vmatprep.subr.bf16.mxu0 0
      %1242 = vmatpush1.bf16.msra.mxu0 0
      %1243 = vmatprep.subr.bf16.mxu0 0
      %1244 = vmatpush1.bf16.msra.mxu0 0
      %1245 = vmatprep.subr.bf16.mxu0 0
      %1246 = vmatpush1.bf16.msra.mxu0 0
      %1247 = vmatprep.subr.bf16.mxu0 0
      %1248 = vmatpush1.bf16.msra.mxu0 %v532
      %1249 = vmatprep.subr.bf16.mxu0 0
      %1250 = vmatpush2.bf16.msra.mxu0 0
      %1251 = vmatprep.subr.bf16.mxu0 0
      %1252 = vmatpush2.bf16.msra.mxu0 0
      %1253 = vmatprep.subr.bf16.mxu0 0
      %1254 = vmatpush2.bf16.msra.mxu0 0
      %1255 = vmatprep.subr.bf16.mxu0 0
      %1256 = vmatpush2.bf16.msra.mxu0 0
      %1257 = vmatprep.subr.bf16.mxu0 0
      %1258 = vmatpush2.bf16.msra.mxu0 0
      %1259 = vmatprep.subr.bf16.mxu0 0
      %1260 = vmatpush2.bf16.msra.mxu0 0
      %1261 = vmatprep.subr.bf16.mxu0 0
      %1262 = vmatpush2.bf16.msra.mxu0 0
      %1263 = vmatprep.subr.bf16.mxu0 0
      %1264 = vmatpush2.bf16.msra.mxu0 0
      %1265 = vmatprep.mubr.bf16.mxu0 0
      %1266 = vmatmul.mubr.bf16.gmra.mxu0 %v367
      %v1267 = vpop.f32.mrf.mxu0
      %v1268 = vadd.f32 0.0, %v1267
      %v1269 = vpop.f32.mrf.mxu0
      %v1270 = vpop.f32.mrf.mxu0
      %v1271 = vpop.f32.mrf.mxu0
      %1272 = vdwg.mxu0
      %v1273 = vadd.f32 %v1228, %v1268
      %1274 = vmatprep.subr.bf16.mxu0 0
      %1275 = vmatpush1.bf16.msra.mxu0 0
      %1276 = vmatprep.subr.bf16.mxu0 0
      %1277 = vmatpush1.bf16.msra.mxu0 0
      %1278 = vmatprep.subr.bf16.mxu0 0
      %1279 = vmatpush1.bf16.msra.mxu0 0
      %1280 = vmatprep.subr.bf16.mxu0 0
      %1281 = vmatpush1.bf16.msra.mxu0 0
      %1282 = vmatprep.subr.bf16.mxu0 0
      %1283 = vmatpush1.bf16.msra.mxu0 0
      %1284 = vmatprep.subr.bf16.mxu0 0
      %1285 = vmatpush1.bf16.msra.mxu0 0
      %1286 = vmatprep.subr.bf16.mxu0 0
      %1287 = vmatpush1.bf16.msra.mxu0 0
      %1288 = vmatprep.subr.bf16.mxu0 0
      %1289 = vmatpush1.bf16.msra.mxu0 %v587
      %1290 = vmatprep.subr.bf16.mxu0 0
      %1291 = vmatpush2.bf16.msra.mxu0 0
      %1292 = vmatprep.subr.bf16.mxu0 0
      %1293 = vmatpush2.bf16.msra.mxu0 0
      %1294 = vmatprep.subr.bf16.mxu0 0
      %1295 = vmatpush2.bf16.msra.mxu0 0
      %1296 = vmatprep.subr.bf16.mxu0 0
      %1297 = vmatpush2.bf16.msra.mxu0 0
      %1298 = vmatprep.subr.bf16.mxu0 0
      %1299 = vmatpush2.bf16.msra.mxu0 0
      %1300 = vmatprep.subr.bf16.mxu0 0
      %1301 = vmatpush2.bf16.msra.mxu0 0
      %1302 = vmatprep.subr.bf16.mxu0 0
      %1303 = vmatpush2.bf16.msra.mxu0 0
      %1304 = vmatprep.subr.bf16.mxu0 0
      %1305 = vmatpush2.bf16.msra.mxu0 0
      %1306 = vmatprep.mubr.bf16.mxu0 0
      %1307 = vmatmul.mubr.bf16.gmra.mxu0 %v418
      %v1308 = vpop.f32.mrf.mxu0
      %v1309 = vadd.f32 0.0, %v1308
      %v1310 = vpop.f32.mrf.mxu0
      %v1311 = vpop.f32.mrf.mxu0
      %v1312 = vpop.f32.mrf.mxu0
      %1313 = vdwg.mxu0
      %v1314 = vadd.f32 %v1273, %v1309
      %1315 = vmatprep.subr.bf16.mxu0 0
      %1316 = vmatpush1.bf16.msra.mxu0 0
      %1317 = vmatprep.subr.bf16.mxu0 0
      %1318 = vmatpush1.bf16.msra.mxu0 0
      %1319 = vmatprep.subr.bf16.mxu0 0
      %1320 = vmatpush1.bf16.msra.mxu0 0
      %1321 = vmatprep.subr.bf16.mxu0 0
      %1322 = vmatpush1.bf16.msra.mxu0 0
      %1323 = vmatprep.subr.bf16.mxu0 0
      %1324 = vmatpush1.bf16.msra.mxu0 0
      %1325 = vmatprep.subr.bf16.mxu0 0
      %1326 = vmatpush1.bf16.msra.mxu0 0
      %1327 = vmatprep.subr.bf16.mxu0 0
      %1328 = vmatpush1.bf16.msra.mxu0 0
      %1329 = vmatprep.subr.bf16.mxu0 0
      %1330 = vmatpush1.bf16.msra.mxu0 %v647
      %1331 = vmatprep.subr.bf16.mxu0 0
      %1332 = vmatpush2.bf16.msra.mxu0 0
      %1333 = vmatprep.subr.bf16.mxu0 0
      %1334 = vmatpush2.bf16.msra.mxu0 0
      %1335 = vmatprep.subr.bf16.mxu0 0
      %1336 = vmatpush2.bf16.msra.mxu0 0
      %1337 = vmatprep.subr.bf16.mxu0 0
      %1338 = vmatpush2.bf16.msra.mxu0 0
      %1339 = vmatprep.subr.bf16.mxu0 0
      %1340 = vmatpush2.bf16.msra.mxu0 0
      %1341 = vmatprep.subr.bf16.mxu0 0
      %1342 = vmatpush2.bf16.msra.mxu0 0
      %1343 = vmatprep.subr.bf16.mxu0 0
      %1344 = vmatpush2.bf16.msra.mxu0 0
      %1345 = vmatprep.subr.bf16.mxu0 0
      %1346 = vmatpush2.bf16.msra.mxu0 0
      %1347 = vmatprep.mubr.bf16.mxu0 0
      %1348 = vmatmul.mubr.bf16.gmra.mxu0 %v469
      %v1349 = vpop.f32.mrf.mxu0
      %v1350 = vadd.f32 0.0, %v1349
      %v1351 = vpop.f32.mrf.mxu0
      %v1352 = vpop.f32.mrf.mxu0
      %v1353 = vpop.f32.mrf.mxu0
      %1354 = vdwg.mxu0
      %v1355 = vadd.f32 %v1314, %v1350
      %1356 = vmatprep.subr.bf16.mxu0 0
      %1357 = vmatpush1.bf16.msra.mxu0 0
      %1358 = vmatprep.subr.bf16.mxu0 0
      %1359 = vmatpush1.bf16.msra.mxu0 0
      %1360 = vmatprep.subr.bf16.mxu0 0
      %1361 = vmatpush1.bf16.msra.mxu0 0
      %1362 = vmatprep.subr.bf16.mxu0 0
      %1363 = vmatpush1.bf16.msra.mxu0 0
      %1364 = vmatprep.subr.bf16.mxu0 0
      %1365 = vmatpush1.bf16.msra.mxu0 0
      %1366 = vmatprep.subr.bf16.mxu0 0
      %1367 = vmatpush1.bf16.msra.mxu0 0
      %1368 = vmatprep.subr.bf16.mxu0 0
      %1369 = vmatpush1.bf16.msra.mxu0 0
      %1370 = vmatprep.subr.bf16.mxu0 0
      %1371 = vmatpush1.bf16.msra.mxu0 %v702
      %1372 = vmatprep.subr.bf16.mxu0 0
      %1373 = vmatpush2.bf16.msra.mxu0 0
      %1374 = vmatprep.subr.bf16.mxu0 0
      %1375 = vmatpush2.bf16.msra.mxu0 0
      %1376 = vmatprep.subr.bf16.mxu0 0
      %1377 = vmatpush2.bf16.msra.mxu0 0
      %1378 = vmatprep.subr.bf16.mxu0 0
      %1379 = vmatpush2.bf16.msra.mxu0 0
      %1380 = vmatprep.subr.bf16.mxu0 0
      %1381 = vmatpush2.bf16.msra.mxu0 0
      %1382 = vmatprep.subr.bf16.mxu0 0
      %1383 = vmatpush2.bf16.msra.mxu0 0
      %1384 = vmatprep.subr.bf16.mxu0 0
      %1385 = vmatpush2.bf16.msra.mxu0 0
      %1386 = vmatprep.subr.bf16.mxu0 0
      %1387 = vmatpush2.bf16.msra.mxu0 0
      %1388 = vmatprep.mubr.bf16.mxu0 0
      %1389 = vmatmul.mubr.bf16.gmra.mxu0 %v529
      %v1390 = vpop.f32.mrf.mxu0
      %v1391 = vadd.f32 0.0, %v1390
      %v1392 = vpop.f32.mrf.mxu0
      %v1393 = vpop.f32.mrf.mxu0
      %v1394 = vpop.f32.mrf.mxu0
      %1395 = vdwg.mxu0
      %v1396 = vadd.f32 %v1355, %v1391
      %1397 = vrot.lane.b32.xlu0 %v521, 119
      %v1398 = vpop.permute.xlu0 %1397
      %1399 = vrot.lane.b32.xlu0 %v522, 119
      %v1400 = vpop.permute.xlu0 %1399
      %v1401 = vsel %vm581, %v1398, %v1400
      %v1403 = vsel %vm262, %v1401, 0
      %1405 = vmatprep.subr.bf16.mxu0 0
      %1406 = vmatpush1.bf16.msra.mxu0 0
      %1407 = vmatprep.subr.bf16.mxu0 0
      %1408 = vmatpush1.bf16.msra.mxu0 0
      %1409 = vmatprep.subr.bf16.mxu0 0
      %1410 = vmatpush1.bf16.msra.mxu0 0
      %1411 = vmatprep.subr.bf16.mxu0 0
      %1412 = vmatpush1.bf16.msra.mxu0 0
      %1413 = vmatprep.subr.bf16.mxu0 0
      %1414 = vmatpush1.bf16.msra.mxu0 0
      %1415 = vmatprep.subr.bf16.mxu0 0
      %1416 = vmatpush1.bf16.msra.mxu0 0
      %1417 = vmatprep.subr.bf16.mxu0 0
      %1418 = vmatpush1.bf16.msra.mxu0 0
      %1419 = vmatprep.subr.bf16.mxu0 0
      %1420 = vmatpush1.bf16.msra.mxu0 %v1403
      %1421 = vmatprep.subr.bf16.mxu0 0
      %1422 = vmatpush2.bf16.msra.mxu0 0
      %1423 = vmatprep.subr.bf16.mxu0 0
      %1424 = vmatpush2.bf16.msra.mxu0 0
      %1425 = vmatprep.subr.bf16.mxu0 0
      %1426 = vmatpush2.bf16.msra.mxu0 0
      %1427 = vmatprep.subr.bf16.mxu0 0
      %1428 = vmatpush2.bf16.msra.mxu0 0
      %1429 = vmatprep.subr.bf16.mxu0 0
      %1430 = vmatpush2.bf16.msra.mxu0 0
      %1431 = vmatprep.subr.bf16.mxu0 0
      %1432 = vmatpush2.bf16.msra.mxu0 0
      %1433 = vmatprep.subr.bf16.mxu0 0
      %1434 = vmatpush2.bf16.msra.mxu0 0
      %1435 = vmatprep.subr.bf16.mxu0 0
      %1436 = vmatpush2.bf16.msra.mxu0 0
      %1437 = vmatprep.mubr.bf16.mxu0 0
      %1438 = vmatmul.mubr.bf16.gmra.mxu0 %v584
      %v1439 = vpop.f32.mrf.mxu0
      %v1440 = vadd.f32 0.0, %v1439
      %v1441 = vpop.f32.mrf.mxu0
      %v1442 = vpop.f32.mrf.mxu0
      %v1443 = vpop.f32.mrf.mxu0
      %1444 = vdwg.mxu0
      %v1445 = vadd.f32 %v1396, %v1440
      %1446 = vrot.lane.b32.xlu0 %v968, 119
      %v1447 = vpop.permute.xlu0 %1446
      %1448 = vrot.lane.b32.xlu0 %v969, 119
      %v1449 = vpop.permute.xlu0 %1448
      %v1450 = vsel %vm581, %v1447, %v1449
      %v1452 = vsel %vm262, %v1450, 0
      %1454 = vmatprep.subr.bf16.mxu0 0
      %1455 = vmatpush1.bf16.msra.mxu0 0
      %1456 = vmatprep.subr.bf16.mxu0 0
      %1457 = vmatpush1.bf16.msra.mxu0 0
      %1458 = vmatprep.subr.bf16.mxu0 0
      %1459 = vmatpush1.bf16.msra.mxu0 0
      %1460 = vmatprep.subr.bf16.mxu0 0
      %1461 = vmatpush1.bf16.msra.mxu0 0
      %1462 = vmatprep.subr.bf16.mxu0 0
      %1463 = vmatpush1.bf16.msra.mxu0 0
      %1464 = vmatprep.subr.bf16.mxu0 0
      %1465 = vmatpush1.bf16.msra.mxu0 0
      %1466 = vmatprep.subr.bf16.mxu0 0
      %1467 = vmatpush1.bf16.msra.mxu0 0
      %1468 = vmatprep.subr.bf16.mxu0 0
      %1469 = vmatpush1.bf16.msra.mxu0 %v1452
      %1470 = vmatprep.subr.bf16.mxu0 0
      %1471 = vmatpush2.bf16.msra.mxu0 0
      %1472 = vmatprep.subr.bf16.mxu0 0
      %1473 = vmatpush2.bf16.msra.mxu0 0
      %1474 = vmatprep.subr.bf16.mxu0 0
      %1475 = vmatpush2.bf16.msra.mxu0 0
      %1476 = vmatprep.subr.bf16.mxu0 0
      %1477 = vmatpush2.bf16.msra.mxu0 0
      %1478 = vmatprep.subr.bf16.mxu0 0
      %1479 = vmatpush2.bf16.msra.mxu0 0
      %1480 = vmatprep.subr.bf16.mxu0 0
      %1481 = vmatpush2.bf16.msra.mxu0 0
      %1482 = vmatprep.subr.bf16.mxu0 0
      %1483 = vmatpush2.bf16.msra.mxu0 0
      %1484 = vmatprep.subr.bf16.mxu0 0
      %1485 = vmatpush2.bf16.msra.mxu0 0
      %1486 = vmatprep.mubr.bf16.mxu0 0
      %1487 = vmatmul.mubr.bf16.gmra.mxu0 %v644
      %v1488 = vpop.f32.mrf.mxu0
      %v1489 = vadd.f32 0.0, %v1488
      %v1490 = vpop.f32.mrf.mxu0
      %v1491 = vpop.f32.mrf.mxu0
      %v1492 = vpop.f32.mrf.mxu0
      %1493 = vdwg.mxu0
      %v1494 = vadd.f32 %v1445, %v1489
      %1495 = vrot.lane.b32.xlu0 %v521, 118
      %v1496 = vpop.permute.xlu0 %1495
      %1497 = vrot.lane.b32.xlu0 %v522, 118
      %v1498 = vpop.permute.xlu0 %1497
      %v1499 = vsel %vm696, %v1496, %v1498
      %v1501 = vsel %vm262, %v1499, 0
      %1503 = vmatprep.subr.bf16.mxu0 0
      %1504 = vmatpush1.bf16.msra.mxu0 0
      %1505 = vmatprep.subr.bf16.mxu0 0
      %1506 = vmatpush1.bf16.msra.mxu0 0
      %1507 = vmatprep.subr.bf16.mxu0 0
      %1508 = vmatpush1.bf16.msra.mxu0 0
      %1509 = vmatprep.subr.bf16.mxu0 0
      %1510 = vmatpush1.bf16.msra.mxu0 0
      %1511 = vmatprep.subr.bf16.mxu0 0
      %1512 = vmatpush1.bf16.msra.mxu0 0
      %1513 = vmatprep.subr.bf16.mxu0 0
      %1514 = vmatpush1.bf16.msra.mxu0 0
      %1515 = vmatprep.subr.bf16.mxu0 0
      %1516 = vmatpush1.bf16.msra.mxu0 0
      %1517 = vmatprep.subr.bf16.mxu0 0
      %1518 = vmatpush1.bf16.msra.mxu0 %v1501
      %1519 = vmatprep.subr.bf16.mxu0 0
      %1520 = vmatpush2.bf16.msra.mxu0 0
      %1521 = vmatprep.subr.bf16.mxu0 0
      %1522 = vmatpush2.bf16.msra.mxu0 0
      %1523 = vmatprep.subr.bf16.mxu0 0
      %1524 = vmatpush2.bf16.msra.mxu0 0
      %1525 = vmatprep.subr.bf16.mxu0 0
      %1526 = vmatpush2.bf16.msra.mxu0 0
      %1527 = vmatprep.subr.bf16.mxu0 0
      %1528 = vmatpush2.bf16.msra.mxu0 0
      %1529 = vmatprep.subr.bf16.mxu0 0
      %1530 = vmatpush2.bf16.msra.mxu0 0
      %1531 = vmatprep.subr.bf16.mxu0 0
      %1532 = vmatpush2.bf16.msra.mxu0 0
      %1533 = vmatprep.subr.bf16.mxu0 0
      %1534 = vmatpush2.bf16.msra.mxu0 0
      %1535 = vmatprep.mubr.bf16.mxu0 0
      %1536 = vmatmul.mubr.bf16.gmra.mxu0 %v699
      %v1537 = vpop.f32.mrf.mxu0
      %v1538 = vadd.f32 0.0, %v1537
      %v1539 = vpop.f32.mrf.mxu0
      %v1540 = vpop.f32.mrf.mxu0
      %v1541 = vpop.f32.mrf.mxu0
      %1542 = vdwg.mxu0
      %v1543 = vadd.f32 %v1494, %v1538
      %v1544 = vadd.f32 %v1543, %v748
      %v1545 = vmax.f32 %v1544, 0.0
      %v1546 = vadd.f32 %v1152, %v1545
      %1547 = vmatprep.subr.bf16.mxu0 0
      %1548 = vmatpush1.bf16.msra.mxu0 0
      %1549 = vmatprep.subr.bf16.mxu0 0
      %1550 = vmatpush1.bf16.msra.mxu0 0
      %1551 = vmatprep.subr.bf16.mxu0 0
      %1552 = vmatpush1.bf16.msra.mxu0 0
      %1553 = vmatprep.subr.bf16.mxu0 0
      %1554 = vmatpush1.bf16.msra.mxu0 0
      %1555 = vmatprep.subr.bf16.mxu0 0
      %1556 = vmatpush1.bf16.msra.mxu0 0
      %1557 = vmatprep.subr.bf16.mxu0 0
      %1558 = vmatpush1.bf16.msra.mxu0 0
      %1559 = vmatprep.subr.bf16.mxu0 0
      %1560 = vmatpush1.bf16.msra.mxu0 0
      %1561 = vmatprep.subr.bf16.mxu0 0
      %1562 = vmatpush1.bf16.msra.mxu0 %v532
      %1563 = vmatprep.subr.bf16.mxu0 0
      %1564 = vmatpush2.bf16.msra.mxu0 0
      %1565 = vmatprep.subr.bf16.mxu0 0
      %1566 = vmatpush2.bf16.msra.mxu0 0
      %1567 = vmatprep.subr.bf16.mxu0 0
      %1568 = vmatpush2.bf16.msra.mxu0 0
      %1569 = vmatprep.subr.bf16.mxu0 0
      %1570 = vmatpush2.bf16.msra.mxu0 0
      %1571 = vmatprep.subr.bf16.mxu0 0
      %1572 = vmatpush2.bf16.msra.mxu0 0
      %1573 = vmatprep.subr.bf16.mxu0 0
      %1574 = vmatpush2.bf16.msra.mxu0 0
      %1575 = vmatprep.subr.bf16.mxu0 0
      %1576 = vmatpush2.bf16.msra.mxu0 0
      %1577 = vmatprep.subr.bf16.mxu0 0
      %1578 = vmatpush2.bf16.msra.mxu0 0
      %1579 = vmatprep.mubr.bf16.mxu0 0
      %1580 = vmatmul.mubr.bf16.gmra.mxu0 %v260
      %v1581 = vpop.f32.mrf.mxu0
      %v1582 = vadd.f32 0.0, %v1581
      %v1583 = vpop.f32.mrf.mxu0
      %v1584 = vpop.f32.mrf.mxu0
      %v1585 = vpop.f32.mrf.mxu0
      %1586 = vdwg.mxu0
      %1587 = vmatprep.subr.bf16.mxu0 0
      %1588 = vmatpush1.bf16.msra.mxu0 0
      %1589 = vmatprep.subr.bf16.mxu0 0
      %1590 = vmatpush1.bf16.msra.mxu0 0
      %1591 = vmatprep.subr.bf16.mxu0 0
      %1592 = vmatpush1.bf16.msra.mxu0 0
      %1593 = vmatprep.subr.bf16.mxu0 0
      %1594 = vmatpush1.bf16.msra.mxu0 0
      %1595 = vmatprep.subr.bf16.mxu0 0
      %1596 = vmatpush1.bf16.msra.mxu0 0
      %1597 = vmatprep.subr.bf16.mxu0 0
      %1598 = vmatpush1.bf16.msra.mxu0 0
      %1599 = vmatprep.subr.bf16.mxu0 0
      %1600 = vmatpush1.bf16.msra.mxu0 0
      %1601 = vmatprep.subr.bf16.mxu0 0
      %1602 = vmatpush1.bf16.msra.mxu0 %v472
      %1603 = vmatprep.subr.bf16.mxu0 0
      %1604 = vmatpush2.bf16.msra.mxu0 0
      %1605 = vmatprep.subr.bf16.mxu0 0
      %1606 = vmatpush2.bf16.msra.mxu0 0
      %1607 = vmatprep.subr.bf16.mxu0 0
      %1608 = vmatpush2.bf16.msra.mxu0 0
      %1609 = vmatprep.subr.bf16.mxu0 0
      %1610 = vmatpush2.bf16.msra.mxu0 0
      %1611 = vmatprep.subr.bf16.mxu0 0
      %1612 = vmatpush2.bf16.msra.mxu0 0
      %1613 = vmatprep.subr.bf16.mxu0 0
      %1614 = vmatpush2.bf16.msra.mxu0 0
      %1615 = vmatprep.subr.bf16.mxu0 0
      %1616 = vmatpush2.bf16.msra.mxu0 0
      %1617 = vmatprep.subr.bf16.mxu0 0
      %1618 = vmatpush2.bf16.msra.mxu0 0
      %1619 = vmatprep.mubr.bf16.mxu0 0
      %1620 = vmatmul.mubr.bf16.gmra.mxu0 %v307
      %v1621 = vpop.f32.mrf.mxu0
      %v1622 = vadd.f32 %v1582, %v1621
      %v1623 = vpop.f32.mrf.mxu0
      %v1624 = vpop.f32.mrf.mxu0
      %v1625 = vpop.f32.mrf.mxu0
      %1626 = vdwg.mxu0
      %1627 = vmatprep.subr.bf16.mxu0 0
      %1628 = vmatpush1.bf16.msra.mxu0 0
      %1629 = vmatprep.subr.bf16.mxu0 0
      %1630 = vmatpush1.bf16.msra.mxu0 0
      %1631 = vmatprep.subr.bf16.mxu0 0
      %1632 = vmatpush1.bf16.msra.mxu0 0
      %1633 = vmatprep.subr.bf16.mxu0 0
      %1634 = vmatpush1.bf16.msra.mxu0 0
      %1635 = vmatprep.subr.bf16.mxu0 0
      %1636 = vmatpush1.bf16.msra.mxu0 0
      %1637 = vmatprep.subr.bf16.mxu0 0
      %1638 = vmatpush1.bf16.msra.mxu0 0
      %1639 = vmatprep.subr.bf16.mxu0 0
      %1640 = vmatpush1.bf16.msra.mxu0 0
      %1641 = vmatprep.subr.bf16.mxu0 0
      %1642 = vmatpush1.bf16.msra.mxu0 %v976
      %1643 = vmatprep.subr.bf16.mxu0 0
      %1644 = vmatpush2.bf16.msra.mxu0 0
      %1645 = vmatprep.subr.bf16.mxu0 0
      %1646 = vmatpush2.bf16.msra.mxu0 0
      %1647 = vmatprep.subr.bf16.mxu0 0
      %1648 = vmatpush2.bf16.msra.mxu0 0
      %1649 = vmatprep.subr.bf16.mxu0 0
      %1650 = vmatpush2.bf16.msra.mxu0 0
      %1651 = vmatprep.subr.bf16.mxu0 0
      %1652 = vmatpush2.bf16.msra.mxu0 0
      %1653 = vmatprep.subr.bf16.mxu0 0
      %1654 = vmatpush2.bf16.msra.mxu0 0
      %1655 = vmatprep.subr.bf16.mxu0 0
      %1656 = vmatpush2.bf16.msra.mxu0 0
      %1657 = vmatprep.subr.bf16.mxu0 0
      %1658 = vmatpush2.bf16.msra.mxu0 0
      %1659 = vmatprep.mubr.bf16.mxu0 0
      %1660 = vmatmul.mubr.bf16.gmra.mxu0 %v367
      %v1661 = vpop.f32.mrf.mxu0
      %v1662 = vadd.f32 0.0, %v1661
      %v1663 = vpop.f32.mrf.mxu0
      %v1664 = vpop.f32.mrf.mxu0
      %v1665 = vpop.f32.mrf.mxu0
      %1666 = vdwg.mxu0
      %v1667 = vadd.f32 %v1622, %v1662
      %1668 = vmatprep.subr.bf16.mxu0 0
      %1669 = vmatpush1.bf16.msra.mxu0 0
      %1670 = vmatprep.subr.bf16.mxu0 0
      %1671 = vmatpush1.bf16.msra.mxu0 0
      %1672 = vmatprep.subr.bf16.mxu0 0
      %1673 = vmatpush1.bf16.msra.mxu0 0
      %1674 = vmatprep.subr.bf16.mxu0 0
      %1675 = vmatpush1.bf16.msra.mxu0 0
      %1676 = vmatprep.subr.bf16.mxu0 0
      %1677 = vmatpush1.bf16.msra.mxu0 0
      %1678 = vmatprep.subr.bf16.mxu0 0
      %1679 = vmatpush1.bf16.msra.mxu0 0
      %1680 = vmatprep.subr.bf16.mxu0 0
      %1681 = vmatpush1.bf16.msra.mxu0 0
      %1682 = vmatprep.subr.bf16.mxu0 0
      %1683 = vmatpush1.bf16.msra.mxu0 %v647
      %1684 = vmatprep.subr.bf16.mxu0 0
      %1685 = vmatpush2.bf16.msra.mxu0 0
      %1686 = vmatprep.subr.bf16.mxu0 0
      %1687 = vmatpush2.bf16.msra.mxu0 0
      %1688 = vmatprep.subr.bf16.mxu0 0
      %1689 = vmatpush2.bf16.msra.mxu0 0
      %1690 = vmatprep.subr.bf16.mxu0 0
      %1691 = vmatpush2.bf16.msra.mxu0 0
      %1692 = vmatprep.subr.bf16.mxu0 0
      %1693 = vmatpush2.bf16.msra.mxu0 0
      %1694 = vmatprep.subr.bf16.mxu0 0
      %1695 = vmatpush2.bf16.msra.mxu0 0
      %1696 = vmatprep.subr.bf16.mxu0 0
      %1697 = vmatpush2.bf16.msra.mxu0 0
      %1698 = vmatprep.subr.bf16.mxu0 0
      %1699 = vmatpush2.bf16.msra.mxu0 0
      %1700 = vmatprep.mubr.bf16.mxu0 0
      %1701 = vmatmul.mubr.bf16.gmra.mxu0 %v418
      %v1702 = vpop.f32.mrf.mxu0
      %v1703 = vadd.f32 0.0, %v1702
      %v1704 = vpop.f32.mrf.mxu0
      %v1705 = vpop.f32.mrf.mxu0
      %v1706 = vpop.f32.mrf.mxu0
      %1707 = vdwg.mxu0
      %v1708 = vadd.f32 %v1667, %v1703
      %1709 = vmatprep.subr.bf16.mxu0 0
      %1710 = vmatpush1.bf16.msra.mxu0 0
      %1711 = vmatprep.subr.bf16.mxu0 0
      %1712 = vmatpush1.bf16.msra.mxu0 0
      %1713 = vmatprep.subr.bf16.mxu0 0
      %1714 = vmatpush1.bf16.msra.mxu0 0
      %1715 = vmatprep.subr.bf16.mxu0 0
      %1716 = vmatpush1.bf16.msra.mxu0 0
      %1717 = vmatprep.subr.bf16.mxu0 0
      %1718 = vmatpush1.bf16.msra.mxu0 0
      %1719 = vmatprep.subr.bf16.mxu0 0
      %1720 = vmatpush1.bf16.msra.mxu0 0
      %1721 = vmatprep.subr.bf16.mxu0 0
      %1722 = vmatpush1.bf16.msra.mxu0 0
      %1723 = vmatprep.subr.bf16.mxu0 0
      %1724 = vmatpush1.bf16.msra.mxu0 %v702
      %1725 = vmatprep.subr.bf16.mxu0 0
      %1726 = vmatpush2.bf16.msra.mxu0 0
      %1727 = vmatprep.subr.bf16.mxu0 0
      %1728 = vmatpush2.bf16.msra.mxu0 0
      %1729 = vmatprep.subr.bf16.mxu0 0
      %1730 = vmatpush2.bf16.msra.mxu0 0
      %1731 = vmatprep.subr.bf16.mxu0 0
      %1732 = vmatpush2.bf16.msra.mxu0 0
      %1733 = vmatprep.subr.bf16.mxu0 0
      %1734 = vmatpush2.bf16.msra.mxu0 0
      %1735 = vmatprep.subr.bf16.mxu0 0
      %1736 = vmatpush2.bf16.msra.mxu0 0
      %1737 = vmatprep.subr.bf16.mxu0 0
      %1738 = vmatpush2.bf16.msra.mxu0 0
      %1739 = vmatprep.subr.bf16.mxu0 0
      %1740 = vmatpush2.bf16.msra.mxu0 0
      %1741 = vmatprep.mubr.bf16.mxu0 0
      %1742 = vmatmul.mubr.bf16.gmra.mxu0 %v469
      %v1743 = vpop.f32.mrf.mxu0
      %v1744 = vadd.f32 0.0, %v1743
      %v1745 = vpop.f32.mrf.mxu0
      %v1746 = vpop.f32.mrf.mxu0
      %v1747 = vpop.f32.mrf.mxu0
      %1748 = vdwg.mxu0
      %v1749 = vadd.f32 %v1708, %v1744
      %1750 = vmatprep.subr.bf16.mxu0 0
      %1751 = vmatpush1.bf16.msra.mxu0 0
      %1752 = vmatprep.subr.bf16.mxu0 0
      %1753 = vmatpush1.bf16.msra.mxu0 0
      %1754 = vmatprep.subr.bf16.mxu0 0
      %1755 = vmatpush1.bf16.msra.mxu0 0
      %1756 = vmatprep.subr.bf16.mxu0 0
      %1757 = vmatpush1.bf16.msra.mxu0 0
      %1758 = vmatprep.subr.bf16.mxu0 0
      %1759 = vmatpush1.bf16.msra.mxu0 0
      %1760 = vmatprep.subr.bf16.mxu0 0
      %1761 = vmatpush1.bf16.msra.mxu0 0
      %1762 = vmatprep.subr.bf16.mxu0 0
      %1763 = vmatpush1.bf16.msra.mxu0 0
      %1764 = vmatprep.subr.bf16.mxu0 0
      %1765 = vmatpush1.bf16.msra.mxu0 %v1107
      %1766 = vmatprep.subr.bf16.mxu0 0
      %1767 = vmatpush2.bf16.msra.mxu0 0
      %1768 = vmatprep.subr.bf16.mxu0 0
      %1769 = vmatpush2.bf16.msra.mxu0 0
      %1770 = vmatprep.subr.bf16.mxu0 0
      %1771 = vmatpush2.bf16.msra.mxu0 0
      %1772 = vmatprep.subr.bf16.mxu0 0
      %1773 = vmatpush2.bf16.msra.mxu0 0
      %1774 = vmatprep.subr.bf16.mxu0 0
      %1775 = vmatpush2.bf16.msra.mxu0 0
      %1776 = vmatprep.subr.bf16.mxu0 0
      %1777 = vmatpush2.bf16.msra.mxu0 0
      %1778 = vmatprep.subr.bf16.mxu0 0
      %1779 = vmatpush2.bf16.msra.mxu0 0
      %1780 = vmatprep.subr.bf16.mxu0 0
      %1781 = vmatpush2.bf16.msra.mxu0 0
      %1782 = vmatprep.mubr.bf16.mxu0 0
      %1783 = vmatmul.mubr.bf16.gmra.mxu0 %v529
      %v1784 = vpop.f32.mrf.mxu0
      %v1785 = vadd.f32 0.0, %v1784
      %v1786 = vpop.f32.mrf.mxu0
      %v1787 = vpop.f32.mrf.mxu0
      %v1788 = vpop.f32.mrf.mxu0
      %1789 = vdwg.mxu0
      %v1790 = vadd.f32 %v1749, %v1785
      %1791 = vmatprep.subr.bf16.mxu0 0
      %1792 = vmatpush1.bf16.msra.mxu0 0
      %1793 = vmatprep.subr.bf16.mxu0 0
      %1794 = vmatpush1.bf16.msra.mxu0 0
      %1795 = vmatprep.subr.bf16.mxu0 0
      %1796 = vmatpush1.bf16.msra.mxu0 0
      %1797 = vmatprep.subr.bf16.mxu0 0
      %1798 = vmatpush1.bf16.msra.mxu0 0
      %1799 = vmatprep.subr.bf16.mxu0 0
      %1800 = vmatpush1.bf16.msra.mxu0 0
      %1801 = vmatprep.subr.bf16.mxu0 0
      %1802 = vmatpush1.bf16.msra.mxu0 0
      %1803 = vmatprep.subr.bf16.mxu0 0
      %1804 = vmatpush1.bf16.msra.mxu0 0
      %1805 = vmatprep.subr.bf16.mxu0 0
      %1806 = vmatpush1.bf16.msra.mxu0 %v1452
      %1807 = vmatprep.subr.bf16.mxu0 0
      %1808 = vmatpush2.bf16.msra.mxu0 0
      %1809 = vmatprep.subr.bf16.mxu0 0
      %1810 = vmatpush2.bf16.msra.mxu0 0
      %1811 = vmatprep.subr.bf16.mxu0 0
      %1812 = vmatpush2.bf16.msra.mxu0 0
      %1813 = vmatprep.subr.bf16.mxu0 0
      %1814 = vmatpush2.bf16.msra.mxu0 0
      %1815 = vmatprep.subr.bf16.mxu0 0
      %1816 = vmatpush2.bf16.msra.mxu0 0
      %1817 = vmatprep.subr.bf16.mxu0 0
      %1818 = vmatpush2.bf16.msra.mxu0 0
      %1819 = vmatprep.subr.bf16.mxu0 0
      %1820 = vmatpush2.bf16.msra.mxu0 0
      %1821 = vmatprep.subr.bf16.mxu0 0
      %1822 = vmatpush2.bf16.msra.mxu0 0
      %1823 = vmatprep.mubr.bf16.mxu0 0
      %1824 = vmatmul.mubr.bf16.gmra.mxu0 %v584
      %v1825 = vpop.f32.mrf.mxu0
      %v1826 = vadd.f32 0.0, %v1825
      %v1827 = vpop.f32.mrf.mxu0
      %v1828 = vpop.f32.mrf.mxu0
      %v1829 = vpop.f32.mrf.mxu0
      %1830 = vdwg.mxu0
      %v1831 = vadd.f32 %v1790, %v1826
      %1832 = vmatprep.subr.bf16.mxu0 0
      %1833 = vmatpush1.bf16.msra.mxu0 0
      %1834 = vmatprep.subr.bf16.mxu0 0
      %1835 = vmatpush1.bf16.msra.mxu0 0
      %1836 = vmatprep.subr.bf16.mxu0 0
      %1837 = vmatpush1.bf16.msra.mxu0 0
      %1838 = vmatprep.subr.bf16.mxu0 0
      %1839 = vmatpush1.bf16.msra.mxu0 0
      %1840 = vmatprep.subr.bf16.mxu0 0
      %1841 = vmatpush1.bf16.msra.mxu0 0
      %1842 = vmatprep.subr.bf16.mxu0 0
      %1843 = vmatpush1.bf16.msra.mxu0 0
      %1844 = vmatprep.subr.bf16.mxu0 0
      %1845 = vmatpush1.bf16.msra.mxu0 0
      %1846 = vmatprep.subr.bf16.mxu0 0
      %1847 = vmatpush1.bf16.msra.mxu0 %v1501
      %1848 = vmatprep.subr.bf16.mxu0 0
      %1849 = vmatpush2.bf16.msra.mxu0 0
      %1850 = vmatprep.subr.bf16.mxu0 0
      %1851 = vmatpush2.bf16.msra.mxu0 0
      %1852 = vmatprep.subr.bf16.mxu0 0
      %1853 = vmatpush2.bf16.msra.mxu0 0
      %1854 = vmatprep.subr.bf16.mxu0 0
      %1855 = vmatpush2.bf16.msra.mxu0 0
      %1856 = vmatprep.subr.bf16.mxu0 0
      %1857 = vmatpush2.bf16.msra.mxu0 0
      %1858 = vmatprep.subr.bf16.mxu0 0
      %1859 = vmatpush2.bf16.msra.mxu0 0
      %1860 = vmatprep.subr.bf16.mxu0 0
      %1861 = vmatpush2.bf16.msra.mxu0 0
      %1862 = vmatprep.subr.bf16.mxu0 0
      %1863 = vmatpush2.bf16.msra.mxu0 0
      %1864 = vmatprep.mubr.bf16.mxu0 0
      %1865 = vmatmul.mubr.bf16.gmra.mxu0 %v644
      %v1866 = vpop.f32.mrf.mxu0
      %v1867 = vadd.f32 0.0, %v1866
      %v1868 = vpop.f32.mrf.mxu0
      %v1869 = vpop.f32.mrf.mxu0
      %v1870 = vpop.f32.mrf.mxu0
      %1871 = vdwg.mxu0
      %v1872 = vadd.f32 %v1831, %v1867
      %1873 = vrot.lane.b32.xlu0 %v968, 118
      %v1874 = vpop.permute.xlu0 %1873
      %1875 = vrot.lane.b32.xlu0 %v969, 118
      %v1876 = vpop.permute.xlu0 %1875
      %v1877 = vsel %vm696, %v1874, %v1876
      %v1879 = vsel %vm262, %v1877, 0
      %1881 = vmatprep.subr.bf16.mxu0 0
      %1882 = vmatpush1.bf16.msra.mxu0 0
      %1883 = vmatprep.subr.bf16.mxu0 0
      %1884 = vmatpush1.bf16.msra.mxu0 0
      %1885 = vmatprep.subr.bf16.mxu0 0
      %1886 = vmatpush1.bf16.msra.mxu0 0
      %1887 = vmatprep.subr.bf16.mxu0 0
      %1888 = vmatpush1.bf16.msra.mxu0 0
      %1889 = vmatprep.subr.bf16.mxu0 0
      %1890 = vmatpush1.bf16.msra.mxu0 0
      %1891 = vmatprep.subr.bf16.mxu0 0
      %1892 = vmatpush1.bf16.msra.mxu0 0
      %1893 = vmatprep.subr.bf16.mxu0 0
      %1894 = vmatpush1.bf16.msra.mxu0 0
      %1895 = vmatprep.subr.bf16.mxu0 0
      %1896 = vmatpush1.bf16.msra.mxu0 %v1879
      %1897 = vmatprep.subr.bf16.mxu0 0
      %1898 = vmatpush2.bf16.msra.mxu0 0
      %1899 = vmatprep.subr.bf16.mxu0 0
      %1900 = vmatpush2.bf16.msra.mxu0 0
      %1901 = vmatprep.subr.bf16.mxu0 0
      %1902 = vmatpush2.bf16.msra.mxu0 0
      %1903 = vmatprep.subr.bf16.mxu0 0
      %1904 = vmatpush2.bf16.msra.mxu0 0
      %1905 = vmatprep.subr.bf16.mxu0 0
      %1906 = vmatpush2.bf16.msra.mxu0 0
      %1907 = vmatprep.subr.bf16.mxu0 0
      %1908 = vmatpush2.bf16.msra.mxu0 0
      %1909 = vmatprep.subr.bf16.mxu0 0
      %1910 = vmatpush2.bf16.msra.mxu0 0
      %1911 = vmatprep.subr.bf16.mxu0 0
      %1912 = vmatpush2.bf16.msra.mxu0 0
      %1913 = vmatprep.mubr.bf16.mxu0 0
      %1914 = vmatmul.mubr.bf16.gmra.mxu0 %v699
      %v1915 = vpop.f32.mrf.mxu0
      %v1916 = vadd.f32 0.0, %v1915
      %v1917 = vpop.f32.mrf.mxu0
      %v1918 = vpop.f32.mrf.mxu0
      %v1919 = vpop.f32.mrf.mxu0
      %1920 = vdwg.mxu0
      %v1921 = vadd.f32 %v1872, %v1916
      %v1922 = vadd.f32 %v1921, %v748
      %v1923 = vmax.f32 %v1922, 0.0
      %v1924 = vadd.f32 %v1546, %v1923
      %v1925 = vmul.f32 %v1924, 0.25
      %v1926 = vunpack.c.l.bf16 %v465
      %v1927 = vunpack.c.l.bf16 %v515
      %v1928 = vunpack.c.h.bf16 %v515
      %1931 = vrot.lane.b32.xlu0 %v1927, 127
      %v1932 = vpop.permute.xlu0 %1931
      %1933 = vrot.lane.b32.xlu0 %v1928, 127
      %v1934 = vpop.permute.xlu0 %1933
      %vm1935 = vcmask 1039360
      %v1936 = vsel %vm1935, %v1932, %v1934
      %v1938 = vadd.f32 %v1926, %v1936
      %v1939 = vunpack.c.l.bf16 %v630
      %v1940 = vunpack.c.h.bf16 %v630
      %1943 = vrot.lane.b32.xlu0 %v1939, 119
      %v1944 = vpop.permute.xlu0 %1943
      %1945 = vrot.lane.b32.xlu0 %v1940, 119
      %v1946 = vpop.permute.xlu0 %1945
      %vm1947 = vcmask 973824
      %v1948 = vsel %vm1947, %v1944, %v1946
      %v1950 = vadd.f32 %v1938, %v1948
      %v1951 = vunpack.c.l.bf16 %v352
      %v1952 = vunpack.c.h.bf16 %v352
      %1955 = vrot.lane.b32.xlu0 %v1951, 118
      %v1956 = vpop.permute.xlu0 %1955
      %1957 = vrot.lane.b32.xlu0 %v1952, 118
      %v1958 = vpop.permute.xlu0 %1957
      %vm1959 = vcmask 965632
      %v1960 = vsel %vm1959, %v1956, %v1958
      %v1962 = vadd.f32 %v1950, %v1960
      %v1963 = vmul.f32 %v1962, 0.25
      %v1964 = vld [vmem:[%s3] sm:$0xf]
      %v1965 = vpack.c.bf16 %v1925, %v1925
      %v1966 = vld [vmem:[%s4] sm:$0xf]
      %v1967 = vpack.c.bf16 %v1963, %v1963
      %v1969 = vsel %vm258, %v1966, 0
      %v1972 = vsel %vm262, %v1967, 0
      %1974 = vmatprep.subr.bf16.mxu0 0
      %1975 = vmatpush1.bf16.msra.mxu0 0
      %1976 = vmatprep.subr.bf16.mxu0 0
      %1977 = vmatpush1.bf16.msra.mxu0 0
      %1978 = vmatprep.subr.bf16.mxu0 0
      %1979 = vmatpush1.bf16.msra.mxu0 0
      %1980 = vmatprep.subr.bf16.mxu0 0
      %1981 = vmatpush1.bf16.msra.mxu0 0
      %1982 = vmatprep.subr.bf16.mxu0 0
      %1983 = vmatpush1.bf16.msra.mxu0 0
      %1984 = vmatprep.subr.bf16.mxu0 0
      %1985 = vmatpush1.bf16.msra.mxu0 0
      %1986 = vmatprep.subr.bf16.mxu0 0
      %1987 = vmatpush1.bf16.msra.mxu0 0
      %1988 = vmatprep.subr.bf16.mxu0 0
      %1989 = vmatpush1.bf16.msra.mxu0 %v1972
      %1990 = vmatprep.subr.bf16.mxu0 0
      %1991 = vmatpush2.bf16.msra.mxu0 0
      %1992 = vmatprep.subr.bf16.mxu0 0
      %1993 = vmatpush2.bf16.msra.mxu0 0
      %1994 = vmatprep.subr.bf16.mxu0 0
      %1995 = vmatpush2.bf16.msra.mxu0 0
      %1996 = vmatprep.subr.bf16.mxu0 0
      %1997 = vmatpush2.bf16.msra.mxu0 0
      %1998 = vmatprep.subr.bf16.mxu0 0
      %1999 = vmatpush2.bf16.msra.mxu0 0
      %2000 = vmatprep.subr.bf16.mxu0 0
      %2001 = vmatpush2.bf16.msra.mxu0 0
      %2002 = vmatprep.subr.bf16.mxu0 0
      %2003 = vmatpush2.bf16.msra.mxu0 0
      %2004 = vmatprep.subr.bf16.mxu0 0
      %2005 = vmatpush2.bf16.msra.mxu0 0
      %2006 = vmatprep.mubr.bf16.mxu0 0
      %2007 = vmatmul.mubr.bf16.gmra.mxu0 %v1969
      %v2008 = vpop.f32.mrf.mxu0
      %v2009 = vadd.f32 0.0, %v2008
      %v2010 = vpop.f32.mrf.mxu0
      %v2011 = vpop.f32.mrf.mxu0
      %v2012 = vpop.f32.mrf.mxu0
      %2013 = vdwg.mxu0
      %v2015 = vsel %vm258, %v1964, 0
      %v2018 = vsel %vm262, %v1965, 0
      %2020 = vmatprep.subr.bf16.mxu0 0
      %2021 = vmatpush1.bf16.msra.mxu0 0
      %2022 = vmatprep.subr.bf16.mxu0 0
      %2023 = vmatpush1.bf16.msra.mxu0 0
      %2024 = vmatprep.subr.bf16.mxu0 0
      %2025 = vmatpush1.bf16.msra.mxu0 0
      %2026 = vmatprep.subr.bf16.mxu0 0
      %2027 = vmatpush1.bf16.msra.mxu0 0
      %2028 = vmatprep.subr.bf16.mxu0 0
      %2029 = vmatpush1.bf16.msra.mxu0 0
      %2030 = vmatprep.subr.bf16.mxu0 0
      %2031 = vmatpush1.bf16.msra.mxu0 0
      %2032 = vmatprep.subr.bf16.mxu0 0
      %2033 = vmatpush1.bf16.msra.mxu0 0
      %2034 = vmatprep.subr.bf16.mxu0 0
      %2035 = vmatpush1.bf16.msra.mxu0 %v2018
      %2036 = vmatprep.subr.bf16.mxu0 0
      %2037 = vmatpush2.bf16.msra.mxu0 0
      %2038 = vmatprep.subr.bf16.mxu0 0
      %2039 = vmatpush2.bf16.msra.mxu0 0
      %2040 = vmatprep.subr.bf16.mxu0 0
      %2041 = vmatpush2.bf16.msra.mxu0 0
      %2042 = vmatprep.subr.bf16.mxu0 0
      %2043 = vmatpush2.bf16.msra.mxu0 0
      %2044 = vmatprep.subr.bf16.mxu0 0
      %2045 = vmatpush2.bf16.msra.mxu0 0
      %2046 = vmatprep.subr.bf16.mxu0 0
      %2047 = vmatpush2.bf16.msra.mxu0 0
      %2048 = vmatprep.subr.bf16.mxu0 0
      %2049 = vmatpush2.bf16.msra.mxu0 0
      %2050 = vmatprep.subr.bf16.mxu0 0
      %2051 = vmatpush2.bf16.msra.mxu0 0
      %2052 = vmatprep.mubr.bf16.mxu0 0
      %2053 = vmatmul.mubr.bf16.gmra.mxu0 %v2015
      %v2054 = vpop.f32.mrf.mxu0
      %v2055 = vadd.f32 %v2009, %v2054
      %v2056 = vpop.f32.mrf.mxu0
      %v2057 = vpop.f32.mrf.mxu0
      %v2058 = vpop.f32.mrf.mxu0
      %2059 = vdwg.mxu0
      %v2060 = vld [vmem:[%s5] sm:$0xff]
      %2062 = vset.pattern.permute.xlu0 0
      %2063 = vperm.xlu0 %2062, %v2060
      %v2064 = vpop.permute.xlu0 %2063
      %v2066 = vadd.f32 %v2055, %v2064
      %2067 = vst [vmem:[%s249] sm:$0xff] %v2066
      %p2068 = scmp.lt.s32.totalorder %s17, 1
      %s2069 = scalar_select %p2068, %s17, 1
      %s2070 = smul.addr %s2069, 8
      %s2071 = scalar_lea.vmem %s6, %s2070
      // Predicated region
      $region45: #{disc_block1.1} parent=43 // pred_check
        %p2072 = pneg %p166
      $region46: #{disc_block1.1} parent=43 // pred_check_branch
        %2074 = sbr.rel (%p2072) target = $region48
      $region47: #{disc_block1.1} parent=43 // pred_region
        _
      $region48: #{disc_block1.1} parent=43 // pred_fallthru
        _
    $region44: #{disc_block1.1} parent=5 // pred_fallthru
      _
    %p2075 = scmp.le.s32.totalorder 2, %s12
    // Predicated region
    $region49: #{disc_block1.1} parent=5 // pred_check
      %p2076 = pneg %p2075
    $region50: #{disc_block1.1} parent=5 // pred_check_branch
      %2078 = sbr.rel (%p2076) target = $region52
    $region51: #{disc_block1.1} parent=5 // pred_region
      %s2079 = ssub.s32 %s12, 2
      // Predicated region
      $region53: #{disc_block1.1} parent=51 // pred_check
        %p2080 = pneg %p172
      $region54: #{disc_block1.1} parent=51 // pred_check_branch
        %2082 = sbr.rel (%p2080) target = $region56
      $region55: #{disc_block1.1} parent=51 // pred_region
        %p2083 = scmp.lt.s32.totalorder %s18, 1
        %s2084 = scalar_select %p2083, %s18, 1
        %s2085 = smul.addr %s2084, 8
        %s2086 = scalar_lea.vmem %s6, %s2085
      $region56: #{disc_block1.1} parent=51 // pred_fallthru
        _
    $region52: #{disc_block1.1} parent=5 // pred_fallthru
      _
  $region6: #{disc_block1.1} parent=0 // loop_footer
    %s16 = sadd.s32 1, %s12
  $region7: #{disc_block1.1} parent=0 // loop_footer_branch
    %11 = sbr.rel target = $region3
  $region8: #{disc_block1.1} parent=0 // loop_exit
    _

</llo_original>
